<compile_context>
chip_gen: v6e
topology: v6e:2x2x1
jax: 0.10.0
libtpu: 0.0.40
codegen_flags: <defaults>
</compile_context>

<pallas_src>
import functools
from collections import namedtuple

import numpy as np
import jax
import jax.numpy as jnp
from jax.experimental import pallas as pl
from jax.experimental.pallas import tpu as pltpu

NEG_SLOPE = 0.01     # nn.LeakyReLU default negative_slope
BN_EPS = 1e-5        # nn.BatchNorm2d default eps
SUBLANE_PACK = 16    # bf16 sublane packing: pad Cin to a multiple so in-kernel concat is aligned

LayerCfg = namedtuple("LayerCfg", ["K", "up", "cin", "cin_pad", "cout"])


def _round_up(v, m):
    return (v + m - 1) // m * m


# --------------------------------------------------------------------------------------- kernel
def _fused_deconv_block_kernel(*refs, tap_offsets, m, apply_act, has_upsample):
    """One fully fused deconv block.

    refs (has_upsample=False): x_ref, w_ref, scale_ref, bias_ref, o_ref
    refs (has_upsample=True) : x_ref, w_ref, scale_ref, bias_ref, wup_ref, o_ref

      x_ref     : (1, Cin_pad, L_ext)   bf16  flat zero-padded image (channels-first)
      w_ref     : (Cout, K*K*Cin_pad)   bf16  folded ConvTranspose2d(stride=1) weight
      scale_ref : (Cout, 1)             f32   folded eval-mode BatchNorm2d scale
      bias_ref  : (Cout, 1)             f32   folded eval-mode BatchNorm2d bias
      wup_ref   : (up*up*Cout, Cout)    bf16  folded ConvTranspose2d(k=up, stride=up) weight
      o_ref     : (1, Cout_eff, m)            Cout_eff = Cout (up==1) or up*up*Cout
    """
    if has_upsample:
        x_ref, w_ref, scale_ref, bias_ref, wup_ref, o_ref = refs
    else:
        x_ref, w_ref, scale_ref, bias_ref, o_ref = refs

    x = x_ref[0]                                            # (Cin_pad, L_ext)
    # In-VMEM im2col: tap (ky,kx) of the 'same' conv is the contiguous lane window [d, d+m),
    # d = ky*Wp + kx, of the flat padded image.  No patch tensor is materialized in HBM.
    slabs = [x[:, d:d + m] for d in tap_offsets]            # K*K x (Cin_pad, m)
    cols = slabs[0] if len(slabs) == 1 else jnp.concatenate(slabs, axis=0)

    # Single folded MXU matmul (contraction K*K*Cin_pad), lane-dense (Cout, m) output.
    y = jnp.dot(w_ref[...], cols, preferred_element_type=jnp.float32)
    y = y * scale_ref[...] + bias_ref[...]                  # eval-mode BatchNorm2d (f32)
    if apply_act:
        y = jnp.where(y >= 0.0, y, NEG_SLOPE * y)           # LeakyReLU
    if has_upsample:
        # Fused ConvTranspose2d(kernel=up, stride=up): per-pixel matmul -> (up*up*Cout, m).
        y = jnp.dot(wup_ref[...], y.astype(jnp.bfloat16),
                    preferred_element_type=jnp.float32)
    o_ref[0] = y.astype(o_ref.dtype)


# ------------------------------------------------------------------------------------- wrappers
def fused_deconv_block(x_nchw, layer, cfg, *, apply_act, out_dtype):
    """ConvTranspose2d(K, stride=1, pad=K//2, no bias) + eval-BN + act [+ ConvT(k=up, stride=up)]."""
    N, Cin, H, W = x_nchw.shape
    K, up, cin_pad, cout = cfg.K, cfg.up, cfg.cin_pad, cfg.cout
    assert Cin == cfg.cin
    assert K % 2 == 1, "stride-1 'same' ConvTranspose2d equivalence requires odd kernel_size"
    p = K // 2
    Hp, Wp = H + 2 * p, W + 2 * p
    L = Hp * Wp
    m = H * Wp                    # flat output columns computed; the (Wp-W) garbage cols get cropped
    l_ext = L + 2 * p             # so every tap window q + d stays inside [0, l_ext)

    # glue: zero-pad (channels to sublane multiple, spatial halo), flatten, cast to bf16
    xq = jnp.pad(x_nchw.astype(jnp.bfloat16),
                 ((0, 0), (0, cin_pad - Cin), (p, p), (p, p)))
    xq = xq.reshape(N, cin_pad, L)
    if l_ext > L:
        xq = jnp.pad(xq, ((0, 0), (0, 0), (0, l_ext - L)))

    tap_offsets = tuple(ky * Wp + kx for ky in range(K) for kx in range(K))
    has_up = up > 1
    cout_eff = cout * up * up if has_up else cout

    kernel = functools.partial(
        _fused_deconv_block_kernel, tap_offsets=tap_offsets, m=m,
        apply_act=apply_act, has_upsample=has_up)

    inputs = [xq, layer["w_fold"], layer["scale"], layer["bias"]]
    in_specs = [
        pl.BlockSpec((1, cin_pad, l_ext), lambda n: (n, 0, 0)),
        pl.BlockSpec(layer["w_fold"].shape, lambda n: (0, 0)),
        pl.BlockSpec(layer["scale"].shape, lambda n: (0, 0)),
        pl.BlockSpec(layer["bias"].shape, lambda n: (0, 0)),
    ]
    if has_up:
        inputs.append(layer["w_up_fold"])
        in_specs.append(pl.BlockSpec(layer["w_up_fold"].shape, lambda n: (0, 0)))

    # TODO(synk): for very large H*W (v7x 64 MiB VMEM), add a second grid axis tiling the
    # flat-spatial dimension; at decoder-scale shapes one image per grid step fits comfortably.
    z = pl.pallas_call(
        kernel,
        out_shape=jax.ShapeDtypeStruct((N, cout_eff, m), out_dtype),
        grid=(N,),
        in_specs=in_specs,
        out_specs=pl.BlockSpec((1, cout_eff, m), lambda n: (n, 0, 0)),
        compiler_params=pltpu.CompilerParams(
            dimension_semantics=("parallel",),          # batch across TensorCores (v7x megacore)
            vmem_limit_bytes=64 * 1024 * 1024),
    )(*inputs)

    # glue: drop horizontal-padding garbage columns; pixel-shuffle the fused upsample result
    z = z.reshape(N, cout_eff, H, Wp)[:, :, :, :W]
    if has_up:
        z = z.reshape(N, cout, up, up, H, W)
        z = jnp.transpose(z, (0, 1, 4, 2, 5, 3)).reshape(N, cout, H * up, W * up)
    return z


# ------------------------------------------------------------------------- parameters / forward
def init_params(key, dims, upsamples, kernel_sizes):
    """Deterministic synthetic parameters matching the PyTorch module; weights pre-folded once."""
    params, raw, cfgs = [], [], []
    for cin, cout, K, up in zip(dims[:-1], dims[1:], kernel_sizes, upsamples):
        assert K % 2 == 1
        key, k1, k2, k3, k4, k5, k6 = jax.random.split(key, 7)
        w1 = 0.1 * jax.random.normal(k1, (cin, cout, K, K), jnp.float32)   # ConvT weight (Cin,Cout,K,K)
        gamma = 1.0 + 0.1 * jax.random.normal(k2, (cout,), jnp.float32)
        beta = 0.1 * jax.random.normal(k3, (cout,), jnp.float32)
        run_mean = 0.05 * jax.random.normal(k4, (cout,), jnp.float32)
        run_var = 1.0 + 0.1 * jnp.abs(jax.random.normal(k5, (cout,), jnp.float32))
        scale = gamma / jnp.sqrt(run_var + BN_EPS)        # fold eval-mode BN into scale/bias
        bias = beta - run_mean * scale

        cin_pad = _round_up(cin, SUBLANE_PACK)
        # dense-'same'-conv weight F[ci,co,ky,kx] = w1[ci,co,K-1-ky,K-1-kx], folded so the
        # contraction axis is ordered (tap-major, channel-minor) matching the in-kernel im2col.
        w_fold = jnp.transpose(w1[:, :, ::-1, ::-1], (1, 2, 3, 0))          # (Cout,K,K,Cin)
        w_fold = jnp.pad(w_fold, ((0, 0), (0, 0), (0, 0), (0, cin_pad - cin)))
        w_fold = w_fold.reshape(cout, K * K * cin_pad).astype(jnp.bfloat16)

        layer = dict(w_fold=w_fold,
                     scale=scale.reshape(cout, 1),
                     bias=bias.reshape(cout, 1))
        r = dict(w1=w1, scale=scale, bias=bias)
        if up > 1:
            w_up = 0.1 * jax.random.normal(k6, (cout, cout, up, up), jnp.float32)
            layer["w_up_fold"] = (jnp.transpose(w_up, (1, 2, 3, 0))
                                  .reshape(cout * up * up, cout).astype(jnp.bfloat16))
            r["w_up"] = w_up
        params.append(layer)
        raw.append(r)
        cfgs.append(LayerCfg(K=K, up=up, cin=cin, cin_pad=cin_pad, cout=cout))
    return params, raw, tuple(cfgs)


def image_decoder_forward(x, params, *, cfgs, target_size):
    """x: (N, C) or NCHW (N, C, 1, 1); returns NCHW (N, dims[-1], H, W)."""
    H, W = target_size
    scale = int(np.prod([c.up for c in cfgs]))
    if x.ndim == 2:
        x = x[:, :, None, None]                            # 'b c -> b c () ()'
    # self.deconv is None (target_size not given at __init__): x.repeat over space
    x = jnp.tile(x, (1, 1, H // scale, W // scale))
    n_layers = len(cfgs)
    for i, (layer, cfg) in enumerate(zip(params, cfgs)):
        is_last = i == n_layers - 1                        # last block uses Identity activation
        x = fused_deconv_block(
            x, layer, cfg, apply_act=not is_last,
            out_dtype=jnp.float32 if is_last else jnp.bfloat16)
        # Dropout2d(p=0.0) == identity
    # TODO(synk): F.interpolate nearest fallback (only hit when prod(upsamples) does not divide
    # target_size) is not implemented; here the deconvnet output matches (H, W) exactly.
    assert x.shape[-2:] == (H, W), (x.shape, (H, W))
    return x


# ------------------------------------------------------------------------- pure-JAX reference
def reference_forward(x, raw, *, cfgs, target_size):
    """Pure-XLA f32 reference of the same ImageDecoder forward (for a numeric check)."""
    H, W = target_size
    scale = int(np.prod([c.up for c in cfgs]))
    if x.ndim == 2:
        x = x[:, :, None, None]
    x = jnp.tile(x.astype(jnp.float32), (1, 1, H // scale, W // scale))
    n_layers = len(cfgs)
    for i, (r, c) in enumerate(zip(raw, cfgs)):
        p = c.K // 2
        # ConvTranspose2d(stride=1, pad=K//2) == 'same' conv with transposed + flipped kernel
        w_conv = jnp.transpose(r["w1"], (1, 0, 2, 3))[:, :, ::-1, ::-1]     # (Cout,Cin,K,K)
        x = jax.lax.conv_general_dilated(
            x, w_conv, window_strides=(1, 1), padding=[(p, p), (p, p)],
            dimension_numbers=("NCHW", "OIHW", "NCHW"))
        x = x * r["scale"][None, :, None, None] + r["bias"][None, :, None, None]
        if i != n_layers - 1:
            x = jnp.where(x >= 0.0, x, NEG_SLOPE * x)
        if c.up > 1:
            t = jnp.einsum("nchw,coyx->nohywx", x, r["w_up"])
            n, o, hh, uy, ww, ux = t.shape
            x = t.reshape(n, o, hh * uy, ww * ux)
    return x


# ----------------------------------------------------------------------------------------- main
if __name__ == "__main__":
    # Small config mirroring ImageDecoder(dims, upsamples, kernel_sizes, target_size=None)
    dims = (32, 16, 8, 3)
    upsamples = (1, 2, 2)            # prod = 4
    kernel_sizes = (5, 5, 5)         # module's default kernel size
    target_size = (32, 32)           # passed at forward time (self.target_size is None)
    batch = 2

    key = jax.random.PRNGKey(0)
    k_x, k_p = jax.random.split(key)
    x = jax.random.normal(k_x, (batch, dims[0]), jnp.float32)   # 2-D (batch, channels) input path
    params, raw, cfgs = init_params(k_p, dims, upsamples, kernel_sizes)

    fwd = jax.jit(functools.partial(image_decoder_forward, cfgs=cfgs, target_size=target_size))
    out = jax.block_until_ready(fwd(x, params))

    assert out.shape == (batch, dims[-1], target_size[0], target_size[1]), out.shape
    assert out.dtype == jnp.float32
    assert bool(jnp.all(jnp.isfinite(out)))

    # numeric check vs. pure-JAX f32 reference (kernel path uses bf16 matmul inputs)
    ref = reference_forward(x, raw, cfgs=cfgs, target_size=target_size)
    rel = float(jnp.linalg.norm((out - ref).astype(jnp.float32))
                / (jnp.linalg.norm(ref.astype(jnp.float32)) + 1e-12))
    assert rel < 0.08, f"kernel/reference mismatch: rel={rel}"

    print("KERNEL_OK")
</pallas_src>

<mosaic_0001>
module attributes {stable_mosaic.version = 11 : i64} {
  func.func @_fused_deconv_block_kernel(%arg0: i32, %arg1: memref<1x32x148xbf16, #tpu.memory_space<vmem>>, %arg2: memref<16x800xbf16, #tpu.memory_space<vmem>>, %arg3: memref<16x1xf32, #tpu.memory_space<vmem>>, %arg4: memref<16x1xf32, #tpu.memory_space<vmem>>, %arg5: memref<1x16x96xbf16, #tpu.memory_space<vmem>>) attributes {dimension_semantics = [#tpu.dimension_semantics<parallel>], iteration_bounds = array<i64: 2>, scalar_prefetch = 0 : i64, scratch_operands = 0 : i64, tpu.core_type = #tpu.core_type<tc>, window_params = [{transform_indices = @transform_0, window_bounds = array<i64: 1, 32, 148>}, {pipeline_mode = #tpu.pipeline_mode<synchronous>, transform_indices = @transform_1, window_bounds = array<i64: 16, 800>}, {pipeline_mode = #tpu.pipeline_mode<synchronous>, transform_indices = @transform_2, window_bounds = array<i64: 16, 1>}, {pipeline_mode = #tpu.pipeline_mode<synchronous>, transform_indices = @transform_3, window_bounds = array<i64: 16, 1>}, {transform_indices = @transform_4, window_bounds = array<i64: 1, 16, 96>}]} {
    %c0 = arith.constant 0 : index
    %c0_0 = arith.constant 0 : index
    %c0_1 = arith.constant 0 : index
    %0 = vector.load %arg1[%c0, %c0_0, %c0_1] : memref<1x32x148xbf16, #tpu.memory_space<vmem>>, vector<1x32x148xbf16>
    %1 = vector.shape_cast %0 : vector<1x32x148xbf16> to vector<32x148xbf16>
    %2 = vector.extract_strided_slice %1 {offsets = [0, 0], sizes = [32, 96], strides = [1, 1]} : vector<32x148xbf16> to vector<32x96xbf16>
    %3 = vector.extract_strided_slice %1 {offsets = [0, 1], sizes = [32, 96], strides = [1, 1]} : vector<32x148xbf16> to vector<32x96xbf16>
    %4 = vector.extract_strided_slice %1 {offsets = [0, 2], sizes = [32, 96], strides = [1, 1]} : vector<32x148xbf16> to vector<32x96xbf16>
    %5 = vector.extract_strided_slice %1 {offsets = [0, 3], sizes = [32, 96], strides = [1, 1]} : vector<32x148xbf16> to vector<32x96xbf16>
    %6 = vector.extract_strided_slice %1 {offsets = [0, 4], sizes = [32, 96], strides = [1, 1]} : vector<32x148xbf16> to vector<32x96xbf16>
    %7 = vector.extract_strided_slice %1 {offsets = [0, 12], sizes = [32, 96], strides = [1, 1]} : vector<32x148xbf16> to vector<32x96xbf16>
    %8 = vector.extract_strided_slice %1 {offsets = [0, 13], sizes = [32, 96], strides = [1, 1]} : vector<32x148xbf16> to vector<32x96xbf16>
    %9 = vector.extract_strided_slice %1 {offsets = [0, 14], sizes = [32, 96], strides = [1, 1]} : vector<32x148xbf16> to vector<32x96xbf16>
    %10 = vector.extract_strided_slice %1 {offsets = [0, 15], sizes = [32, 96], strides = [1, 1]} : vector<32x148xbf16> to vector<32x96xbf16>
    %11 = vector.extract_strided_slice %1 {offsets = [0, 16], sizes = [32, 96], strides = [1, 1]} : vector<32x148xbf16> to vector<32x96xbf16>
    %12 = vector.extract_strided_slice %1 {offsets = [0, 24], sizes = [32, 96], strides = [1, 1]} : vector<32x148xbf16> to vector<32x96xbf16>
    %13 = vector.extract_strided_slice %1 {offsets = [0, 25], sizes = [32, 96], strides = [1, 1]} : vector<32x148xbf16> to vector<32x96xbf16>
    %14 = vector.extract_strided_slice %1 {offsets = [0, 26], sizes = [32, 96], strides = [1, 1]} : vector<32x148xbf16> to vector<32x96xbf16>
    %15 = vector.extract_strided_slice %1 {offsets = [0, 27], sizes = [32, 96], strides = [1, 1]} : vector<32x148xbf16> to vector<32x96xbf16>
    %16 = vector.extract_strided_slice %1 {offsets = [0, 28], sizes = [32, 96], strides = [1, 1]} : vector<32x148xbf16> to vector<32x96xbf16>
    %17 = vector.extract_strided_slice %1 {offsets = [0, 36], sizes = [32, 96], strides = [1, 1]} : vector<32x148xbf16> to vector<32x96xbf16>
    %18 = vector.extract_strided_slice %1 {offsets = [0, 37], sizes = [32, 96], strides = [1, 1]} : vector<32x148xbf16> to vector<32x96xbf16>
    %19 = vector.extract_strided_slice %1 {offsets = [0, 38], sizes = [32, 96], strides = [1, 1]} : vector<32x148xbf16> to vector<32x96xbf16>
    %20 = vector.extract_strided_slice %1 {offsets = [0, 39], sizes = [32, 96], strides = [1, 1]} : vector<32x148xbf16> to vector<32x96xbf16>
    %21 = vector.extract_strided_slice %1 {offsets = [0, 40], sizes = [32, 96], strides = [1, 1]} : vector<32x148xbf16> to vector<32x96xbf16>
    %22 = vector.extract_strided_slice %1 {offsets = [0, 48], sizes = [32, 96], strides = [1, 1]} : vector<32x148xbf16> to vector<32x96xbf16>
    %23 = vector.extract_strided_slice %1 {offsets = [0, 49], sizes = [32, 96], strides = [1, 1]} : vector<32x148xbf16> to vector<32x96xbf16>
    %24 = vector.extract_strided_slice %1 {offsets = [0, 50], sizes = [32, 96], strides = [1, 1]} : vector<32x148xbf16> to vector<32x96xbf16>
    %25 = vector.extract_strided_slice %1 {offsets = [0, 51], sizes = [32, 96], strides = [1, 1]} : vector<32x148xbf16> to vector<32x96xbf16>
    %26 = vector.extract_strided_slice %1 {offsets = [0, 52], sizes = [32, 96], strides = [1, 1]} : vector<32x148xbf16> to vector<32x96xbf16>
    %27 = tpu.concatenate %2, %3, %4, %5, %6, %7, %8, %9, %10, %11, %12, %13, %14, %15, %16, %17 in 0 : vector<32x96xbf16>, vector<32x96xbf16>, vector<32x96xbf16>, vector<32x96xbf16>, vector<32x96xbf16>, vector<32x96xbf16>, vector<32x96xbf16>, vector<32x96xbf16>, vector<32x96xbf16>, vector<32x96xbf16>, vector<32x96xbf16>, vector<32x96xbf16>, vector<32x96xbf16>, vector<32x96xbf16>, vector<32x96xbf16>, vector<32x96xbf16> -> vector<512x96xbf16>
    %28 = tpu.concatenate %18, %19, %20, %21, %22, %23, %24, %25, %26 in 0 : vector<32x96xbf16>, vector<32x96xbf16>, vector<32x96xbf16>, vector<32x96xbf16>, vector<32x96xbf16>, vector<32x96xbf16>, vector<32x96xbf16>, vector<32x96xbf16>, vector<32x96xbf16> -> vector<288x96xbf16>
    %29 = tpu.concatenate %27, %28 in 0 : vector<512x96xbf16>, vector<288x96xbf16> -> vector<800x96xbf16>
    %c0_2 = arith.constant 0 : index
    %c0_3 = arith.constant 0 : index
    %30 = vector.load %arg2[%c0_2, %c0_3] : memref<16x800xbf16, #tpu.memory_space<vmem>>, vector<16x800xbf16>
    %cst = arith.constant dense<0.000000e+00> : vector<16x96xf32>
    %31 = tpu.matmul %30, %29, %cst {dimension_numbers = #tpu.dot_dimension_numbers<[1], [0], [0], [1], [0, 0, 1, 1], [], []>} : vector<16x800xbf16>, vector<800x96xbf16>, vector<16x96xf32> -> vector<16x96xf32>
    %c0_4 = arith.constant 0 : index
    %c0_5 = arith.constant 0 : index
    %32 = vector.load %arg3[%c0_4, %c0_5] : memref<16x1xf32, #tpu.memory_space<vmem>>, vector<16x1xf32>
    %33 = vector.broadcast %32 : vector<16x1xf32> to vector<16x96xf32>
    %34 = arith.mulf %31, %33 : vector<16x96xf32>
    %c0_6 = arith.constant 0 : index
    %c0_7 = arith.constant 0 : index
    %35 = vector.load %arg4[%c0_6, %c0_7] : memref<16x1xf32, #tpu.memory_space<vmem>>, vector<16x1xf32>
    %36 = vector.broadcast %35 : vector<16x1xf32> to vector<16x96xf32>
    %37 = arith.addf %34, %36 : vector<16x96xf32>
    %cst_8 = arith.constant 0.000000e+00 : f32
    %38 = vector.broadcast %cst_8 : f32 to vector<16x96xf32>
    %39 = arith.cmpf oge, %37, %38 : vector<16x96xf32>
    %cst_9 = arith.constant 0.00999999977 : f32
    %40 = vector.broadcast %cst_9 : f32 to vector<16x96xf32>
    %41 = arith.mulf %40, %37 : vector<16x96xf32>
    %42 = arith.select %39, %37, %41 : vector<16x96xi1>, vector<16x96xf32>
    %43 = arith.truncf %42 : vector<16x96xf32> to vector<16x96xbf16>
    %c0_10 = arith.constant 0 : index
    %c0_11 = arith.constant 0 : index
    %c0_12 = arith.constant 0 : index
    %44 = vector.load %arg5[%c0_10, %c0_11, %c0_12] : memref<1x16x96xbf16, #tpu.memory_space<vmem>>, vector<1x16x96xbf16>
    %45 = vector.shape_cast %44 : vector<1x16x96xbf16> to vector<16x96xbf16>
    %46 = vector.shape_cast %43 : vector<16x96xbf16> to vector<1x16x96xbf16>
    tpu.vector_store %arg5[%c0_10, %c0_11, %c0_12], %46 {strides = array<i32>} : memref<1x16x96xbf16, #tpu.memory_space<vmem>>, vector<1x16x96xbf16>,
    return
  }
  func.func @transform_0(%arg0: i32) -> (i32, i32, i32) {
    %c0_i32 = arith.constant 0 : i32
    %c0_i32_0 = arith.constant 0 : i32
    %c0_i32_1 = arith.constant 0 : i32
    return %arg0, %c0_i32, %c0_i32_0 : i32, i32, i32
  }
  func.func @transform_1(%arg0: i32) -> (i32, i32) {
    %c0_i32 = arith.constant 0 : i32
    %c0_i32_0 = arith.constant 0 : i32
    %c0_i32_1 = arith.constant 0 : i32
    return %c0_i32, %c0_i32_0 : i32, i32
  }
  func.func @transform_2(%arg0: i32) -> (i32, i32) {
    %c0_i32 = arith.constant 0 : i32
    %c0_i32_0 = arith.constant 0 : i32
    %c0_i32_1 = arith.constant 0 : i32
    return %c0_i32, %c0_i32_0 : i32, i32
  }
  func.func @transform_3(%arg0: i32) -> (i32, i32) {
    %c0_i32 = arith.constant 0 : i32
    %c0_i32_0 = arith.constant 0 : i32
    %c0_i32_1 = arith.constant 0 : i32
    return %c0_i32, %c0_i32_0 : i32, i32
  }
  func.func @transform_4(%arg0: i32) -> (i32, i32, i32) {
    %c0_i32 = arith.constant 0 : i32
    %c0_i32_0 = arith.constant 0 : i32
    %c0_i32_1 = arith.constant 0 : i32
    return %arg0, %c0_i32, %c0_i32_0 : i32, i32, i32
  }
}

module attributes {stable_mosaic.version = 11 : i64} {
  func.func @_fused_deconv_block_kernel(%arg0: i32, %arg1: memref<1x16x148xbf16, #tpu.memory_space<vmem>>, %arg2: memref<8x400xbf16, #tpu.memory_space<vmem>>, %arg3: memref<8x1xf32, #tpu.memory_space<vmem>>, %arg4: memref<8x1xf32, #tpu.memory_space<vmem>>, %arg5: memref<32x8xbf16, #tpu.memory_space<vmem>>, %arg6: memref<1x32x96xbf16, #tpu.memory_space<vmem>>) attributes {dimension_semantics = [#tpu.dimension_semantics<parallel>], iteration_bounds = array<i64: 2>, scalar_prefetch = 0 : i64, scratch_operands = 0 : i64, tpu.core_type = #tpu.core_type<tc>, window_params = [{transform_indices = @transform_0, window_bounds = array<i64: 1, 16, 148>}, {pipeline_mode = #tpu.pipeline_mode<synchronous>, transform_indices = @transform_1, window_bounds = array<i64: 8, 400>}, {pipeline_mode = #tpu.pipeline_mode<synchronous>, transform_indices = @transform_2, window_bounds = array<i64: 8, 1>}, {pipeline_mode = #tpu.pipeline_mode<synchronous>, transform_indices = @transform_3, window_bounds = array<i64: 8, 1>}, {pipeline_mode = #tpu.pipeline_mode<synchronous>, transform_indices = @transform_4, window_bounds = array<i64: 32, 8>}, {transform_indices = @transform_5, window_bounds = array<i64: 1, 32, 96>}]} {
    %c0 = arith.constant 0 : index
    %c0_0 = arith.constant 0 : index
    %c0_1 = arith.constant 0 : index
    %0 = vector.load %arg1[%c0, %c0_0, %c0_1] : memref<1x16x148xbf16, #tpu.memory_space<vmem>>, vector<1x16x148xbf16>
    %1 = vector.shape_cast %0 : vector<1x16x148xbf16> to vector<16x148xbf16>
    %2 = vector.extract_strided_slice %1 {offsets = [0, 0], sizes = [16, 96], strides = [1, 1]} : vector<16x148xbf16> to vector<16x96xbf16>
    %3 = vector.extract_strided_slice %1 {offsets = [0, 1], sizes = [16, 96], strides = [1, 1]} : vector<16x148xbf16> to vector<16x96xbf16>
    %4 = vector.extract_strided_slice %1 {offsets = [0, 2], sizes = [16, 96], strides = [1, 1]} : vector<16x148xbf16> to vector<16x96xbf16>
    %5 = vector.extract_strided_slice %1 {offsets = [0, 3], sizes = [16, 96], strides = [1, 1]} : vector<16x148xbf16> to vector<16x96xbf16>
    %6 = vector.extract_strided_slice %1 {offsets = [0, 4], sizes = [16, 96], strides = [1, 1]} : vector<16x148xbf16> to vector<16x96xbf16>
    %7 = vector.extract_strided_slice %1 {offsets = [0, 12], sizes = [16, 96], strides = [1, 1]} : vector<16x148xbf16> to vector<16x96xbf16>
    %8 = vector.extract_strided_slice %1 {offsets = [0, 13], sizes = [16, 96], strides = [1, 1]} : vector<16x148xbf16> to vector<16x96xbf16>
    %9 = vector.extract_strided_slice %1 {offsets = [0, 14], sizes = [16, 96], strides = [1, 1]} : vector<16x148xbf16> to vector<16x96xbf16>
    %10 = vector.extract_strided_slice %1 {offsets = [0, 15], sizes = [16, 96], strides = [1, 1]} : vector<16x148xbf16> to vector<16x96xbf16>
    %11 = vector.extract_strided_slice %1 {offsets = [0, 16], sizes = [16, 96], strides = [1, 1]} : vector<16x148xbf16> to vector<16x96xbf16>
    %12 = vector.extract_strided_slice %1 {offsets = [0, 24], sizes = [16, 96], strides = [1, 1]} : vector<16x148xbf16> to vector<16x96xbf16>
    %13 = vector.extract_strided_slice %1 {offsets = [0, 25], sizes = [16, 96], strides = [1, 1]} : vector<16x148xbf16> to vector<16x96xbf16>
    %14 = vector.extract_strided_slice %1 {offsets = [0, 26], sizes = [16, 96], strides = [1, 1]} : vector<16x148xbf16> to vector<16x96xbf16>
    %15 = vector.extract_strided_slice %1 {offsets = [0, 27], sizes = [16, 96], strides = [1, 1]} : vector<16x148xbf16> to vector<16x96xbf16>
    %16 = vector.extract_strided_slice %1 {offsets = [0, 28], sizes = [16, 96], strides = [1, 1]} : vector<16x148xbf16> to vector<16x96xbf16>
    %17 = vector.extract_strided_slice %1 {offsets = [0, 36], sizes = [16, 96], strides = [1, 1]} : vector<16x148xbf16> to vector<16x96xbf16>
    %18 = vector.extract_strided_slice %1 {offsets = [0, 37], sizes = [16, 96], strides = [1, 1]} : vector<16x148xbf16> to vector<16x96xbf16>
    %19 = vector.extract_strided_slice %1 {offsets = [0, 38], sizes = [16, 96], strides = [1, 1]} : vector<16x148xbf16> to vector<16x96xbf16>
    %20 = vector.extract_strided_slice %1 {offsets = [0, 39], sizes = [16, 96], strides = [1, 1]} : vector<16x148xbf16> to vector<16x96xbf16>
    %21 = vector.extract_strided_slice %1 {offsets = [0, 40], sizes = [16, 96], strides = [1, 1]} : vector<16x148xbf16> to vector<16x96xbf16>
    %22 = vector.extract_strided_slice %1 {offsets = [0, 48], sizes = [16, 96], strides = [1, 1]} : vector<16x148xbf16> to vector<16x96xbf16>
    %23 = vector.extract_strided_slice %1 {offsets = [0, 49], sizes = [16, 96], strides = [1, 1]} : vector<16x148xbf16> to vector<16x96xbf16>
    %24 = vector.extract_strided_slice %1 {offsets = [0, 50], sizes = [16, 96], strides = [1, 1]} : vector<16x148xbf16> to vector<16x96xbf16>
    %25 = vector.extract_strided_slice %1 {offsets = [0, 51], sizes = [16, 96], strides = [1, 1]} : vector<16x148xbf16> to vector<16x96xbf16>
    %26 = vector.extract_strided_slice %1 {offsets = [0, 52], sizes = [16, 96], strides = [1, 1]} : vector<16x148xbf16> to vector<16x96xbf16>
    %27 = tpu.concatenate %2, %3, %4, %5, %6, %7, %8, %9, %10, %11, %12, %13, %14, %15, %16, %17 in 0 : vector<16x96xbf16>, vector<16x96xbf16>, vector<16x96xbf16>, vector<16x96xbf16>, vector<16x96xbf16>, vector<16x96xbf16>, vector<16x96xbf16>, vector<16x96xbf16>, vector<16x96xbf16>, vector<16x96xbf16>, vector<16x96xbf16>, vector<16x96xbf16>, vector<16x96xbf16>, vector<16x96xbf16>, vector<16x96xbf16>, vector<16x96xbf16> -> vector<256x96xbf16>
    %28 = tpu.concatenate %18, %19, %20, %21, %22, %23, %24, %25, %26 in 0 : vector<16x96xbf16>, vector<16x96xbf16>, vector<16x96xbf16>, vector<16x96xbf16>, vector<16x96xbf16>, vector<16x96xbf16>, vector<16x96xbf16>, vector<16x96xbf16>, vector<16x96xbf16> -> vector<144x96xbf16>
    %29 = tpu.concatenate %27, %28 in 0 : vector<256x96xbf16>, vector<144x96xbf16> -> vector<400x96xbf16>
    %c0_2 = arith.constant 0 : index
    %c0_3 = arith.constant 0 : index
    %30 = vector.load %arg2[%c0_2, %c0_3] : memref<8x400xbf16, #tpu.memory_space<vmem>>, vector<8x400xbf16>
    %cst = arith.constant dense<0.000000e+00> : vector<8x96xf32>
    %31 = tpu.matmul %30, %29, %cst {dimension_numbers = #tpu.dot_dimension_numbers<[1], [0], [0], [1], [0, 0, 1, 1], [], []>} : vector<8x400xbf16>, vector<400x96xbf16>, vector<8x96xf32> -> vector<8x96xf32>
    %c0_4 = arith.constant 0 : index
    %c0_5 = arith.constant 0 : index
    %32 = vector.load %arg3[%c0_4, %c0_5] : memref<8x1xf32, #tpu.memory_space<vmem>>, vector<8x1xf32>
    %33 = vector.broadcast %32 : vector<8x1xf32> to vector<8x96xf32>
    %34 = arith.mulf %31, %33 : vector<8x96xf32>
    %c0_6 = arith.constant 0 : index
    %c0_7 = arith.constant 0 : index
    %35 = vector.load %arg4[%c0_6, %c0_7] : memref<8x1xf32, #tpu.memory_space<vmem>>, vector<8x1xf32>
    %36 = vector.broadcast %35 : vector<8x1xf32> to vector<8x96xf32>
    %37 = arith.addf %34, %36 : vector<8x96xf32>
    %cst_8 = arith.constant 0.000000e+00 : f32
    %38 = vector.broadcast %cst_8 : f32 to vector<8x96xf32>
    %39 = arith.cmpf oge, %37, %38 : vector<8x96xf32>
    %cst_9 = arith.constant 0.00999999977 : f32
    %40 = vector.broadcast %cst_9 : f32 to vector<8x96xf32>
    %41 = arith.mulf %40, %37 : vector<8x96xf32>
    %42 = arith.select %39, %37, %41 : vector<8x96xi1>, vector<8x96xf32>
    %c0_10 = arith.constant 0 : index
    %c0_11 = arith.constant 0 : index
    %43 = vector.load %arg5[%c0_10, %c0_11] : memref<32x8xbf16, #tpu.memory_space<vmem>>, vector<32x8xbf16>
    %44 = arith.truncf %42 : vector<8x96xf32> to vector<8x96xbf16>
    %cst_12 = arith.constant dense<0.000000e+00> : vector<32x96xf32>
    %45 = tpu.matmul %43, %44, %cst_12 {dimension_numbers = #tpu.dot_dimension_numbers<[1], [0], [0], [1], [0, 0, 1, 1], [], []>} : vector<32x8xbf16>, vector<8x96xbf16>, vector<32x96xf32> -> vector<32x96xf32>
    %46 = arith.truncf %45 : vector<32x96xf32> to vector<32x96xbf16>
    %c0_13 = arith.constant 0 : index
    %c0_14 = arith.constant 0 : index
    %c0_15 = arith.constant 0 : index
    %47 = vector.load %arg6[%c0_13, %c0_14, %c0_15] : memref<1x32x96xbf16, #tpu.memory_space<vmem>>, vector<1x32x96xbf16>
    %48 = vector.shape_cast %47 : vector<1x32x96xbf16> to vector<32x96xbf16>
    %49 = vector.shape_cast %46 : vector<32x96xbf16> to vector<1x32x96xbf16>
    tpu.vector_store %arg6[%c0_13, %c0_14, %c0_15], %49 {strides = array<i32>} : memref<1x32x96xbf16, #tpu.memory_space<vmem>>, vector<1x32x96xbf16>,
    return
  }
  func.func @transform_0(%arg0: i32) -> (i32, i32, i32) {
    %c0_i32 = arith.constant 0 : i32
    %c0_i32_0 = arith.constant 0 : i32
    %c0_i32_1 = arith.constant 0 : i32
    return %arg0, %c0_i32, %c0_i32_0 : i32, i32, i32
  }
  func.func @transform_1(%arg0: i32) -> (i32, i32) {
    %c0_i32 = arith.constant 0 : i32
    %c0_i32_0 = arith.constant 0 : i32
    %c0_i32_1 = arith.constant 0 : i32
    return %c0_i32, %c0_i32_0 : i32, i32
  }
  func.func @transform_2(%arg0: i32) -> (i32, i32) {
    %c0_i32 = arith.constant 0 : i32
    %c0_i32_0 = arith.constant 0 : i32
    %c0_i32_1 = arith.constant 0 : i32
    return %c0_i32, %c0_i32_0 : i32, i32
  }
  func.func @transform_3(%arg0: i32) -> (i32, i32) {
    %c0_i32 = arith.constant 0 : i32
    %c0_i32_0 = arith.constant 0 : i32
    %c0_i32_1 = arith.constant 0 : i32
    return %c0_i32, %c0_i32_0 : i32, i32
  }
  func.func @transform_4(%arg0: i32) -> (i32, i32) {
    %c0_i32 = arith.constant 0 : i32
    %c0_i32_0 = arith.constant 0 : i32
    %c0_i32_1 = arith.constant 0 : i32
    return %c0_i32, %c0_i32_0 : i32, i32
  }
  func.func @transform_5(%arg0: i32) -> (i32, i32, i32) {
    %c0_i32 = arith.constant 0 : i32
    %c0_i32_0 = arith.constant 0 : i32
    %c0_i32_1 = arith.constant 0 : i32
    return %arg0, %c0_i32, %c0_i32_0 : i32, i32, i32
  }
}

module attributes {stable_mosaic.version = 11 : i64} {
  func.func @_fused_deconv_block_kernel(%arg0: i32, %arg1: memref<1x16x404xbf16, #tpu.memory_space<vmem>>, %arg2: memref<3x400xbf16, #tpu.memory_space<vmem>>, %arg3: memref<3x1xf32, #tpu.memory_space<vmem>>, %arg4: memref<3x1xf32, #tpu.memory_space<vmem>>, %arg5: memref<12x3xbf16, #tpu.memory_space<vmem>>, %arg6: memref<1x12x320xf32, #tpu.memory_space<vmem>>) attributes {dimension_semantics = [#tpu.dimension_semantics<parallel>], iteration_bounds = array<i64: 2>, scalar_prefetch = 0 : i64, scratch_operands = 0 : i64, tpu.core_type = #tpu.core_type<tc>, window_params = [{transform_indices = @transform_0, window_bounds = array<i64: 1, 16, 404>}, {pipeline_mode = #tpu.pipeline_mode<synchronous>, transform_indices = @transform_1, window_bounds = array<i64: 3, 400>}, {pipeline_mode = #tpu.pipeline_mode<synchronous>, transform_indices = @transform_2, window_bounds = array<i64: 3, 1>}, {pipeline_mode = #tpu.pipeline_mode<synchronous>, transform_indices = @transform_3, window_bounds = array<i64: 3, 1>}, {pipeline_mode = #tpu.pipeline_mode<synchronous>, transform_indices = @transform_4, window_bounds = array<i64: 12, 3>}, {transform_indices = @transform_5, window_bounds = array<i64: 1, 12, 320>}]} {
    %c0 = arith.constant 0 : index
    %c0_0 = arith.constant 0 : index
    %c0_1 = arith.constant 0 : index
    %0 = vector.load %arg1[%c0, %c0_0, %c0_1] : memref<1x16x404xbf16, #tpu.memory_space<vmem>>, vector<1x16x404xbf16>
    %1 = vector.shape_cast %0 : vector<1x16x404xbf16> to vector<16x404xbf16>
    %2 = vector.extract_strided_slice %1 {offsets = [0, 0], sizes = [16, 320], strides = [1, 1]} : vector<16x404xbf16> to vector<16x320xbf16>
    %3 = vector.extract_strided_slice %1 {offsets = [0, 1], sizes = [16, 320], strides = [1, 1]} : vector<16x404xbf16> to vector<16x320xbf16>
    %4 = vector.extract_strided_slice %1 {offsets = [0, 2], sizes = [16, 320], strides = [1, 1]} : vector<16x404xbf16> to vector<16x320xbf16>
    %5 = vector.extract_strided_slice %1 {offsets = [0, 3], sizes = [16, 320], strides = [1, 1]} : vector<16x404xbf16> to vector<16x320xbf16>
    %6 = vector.extract_strided_slice %1 {offsets = [0, 4], sizes = [16, 320], strides = [1, 1]} : vector<16x404xbf16> to vector<16x320xbf16>
    %7 = vector.extract_strided_slice %1 {offsets = [0, 20], sizes = [16, 320], strides = [1, 1]} : vector<16x404xbf16> to vector<16x320xbf16>
    %8 = vector.extract_strided_slice %1 {offsets = [0, 21], sizes = [16, 320], strides = [1, 1]} : vector<16x404xbf16> to vector<16x320xbf16>
    %9 = vector.extract_strided_slice %1 {offsets = [0, 22], sizes = [16, 320], strides = [1, 1]} : vector<16x404xbf16> to vector<16x320xbf16>
    %10 = vector.extract_strided_slice %1 {offsets = [0, 23], sizes = [16, 320], strides = [1, 1]} : vector<16x404xbf16> to vector<16x320xbf16>
    %11 = vector.extract_strided_slice %1 {offsets = [0, 24], sizes = [16, 320], strides = [1, 1]} : vector<16x404xbf16> to vector<16x320xbf16>
    %12 = vector.extract_strided_slice %1 {offsets = [0, 40], sizes = [16, 320], strides = [1, 1]} : vector<16x404xbf16> to vector<16x320xbf16>
    %13 = vector.extract_strided_slice %1 {offsets = [0, 41], sizes = [16, 320], strides = [1, 1]} : vector<16x404xbf16> to vector<16x320xbf16>
    %14 = vector.extract_strided_slice %1 {offsets = [0, 42], sizes = [16, 320], strides = [1, 1]} : vector<16x404xbf16> to vector<16x320xbf16>
    %15 = vector.extract_strided_slice %1 {offsets = [0, 43], sizes = [16, 320], strides = [1, 1]} : vector<16x404xbf16> to vector<16x320xbf16>
    %16 = vector.extract_strided_slice %1 {offsets = [0, 44], sizes = [16, 320], strides = [1, 1]} : vector<16x404xbf16> to vector<16x320xbf16>
    %17 = vector.extract_strided_slice %1 {offsets = [0, 60], sizes = [16, 320], strides = [1, 1]} : vector<16x404xbf16> to vector<16x320xbf16>
    %18 = vector.extract_strided_slice %1 {offsets = [0, 61], sizes = [16, 320], strides = [1, 1]} : vector<16x404xbf16> to vector<16x320xbf16>
    %19 = vector.extract_strided_slice %1 {offsets = [0, 62], sizes = [16, 320], strides = [1, 1]} : vector<16x404xbf16> to vector<16x320xbf16>
    %20 = vector.extract_strided_slice %1 {offsets = [0, 63], sizes = [16, 320], strides = [1, 1]} : vector<16x404xbf16> to vector<16x320xbf16>
    %21 = vector.extract_strided_slice %1 {offsets = [0, 64], sizes = [16, 320], strides = [1, 1]} : vector<16x404xbf16> to vector<16x320xbf16>
    %22 = vector.extract_strided_slice %1 {offsets = [0, 80], sizes = [16, 320], strides = [1, 1]} : vector<16x404xbf16> to vector<16x320xbf16>
    %23 = vector.extract_strided_slice %1 {offsets = [0, 81], sizes = [16, 320], strides = [1, 1]} : vector<16x404xbf16> to vector<16x320xbf16>
    %24 = vector.extract_strided_slice %1 {offsets = [0, 82], sizes = [16, 320], strides = [1, 1]} : vector<16x404xbf16> to vector<16x320xbf16>
    %25 = vector.extract_strided_slice %1 {offsets = [0, 83], sizes = [16, 320], strides = [1, 1]} : vector<16x404xbf16> to vector<16x320xbf16>
    %26 = vector.extract_strided_slice %1 {offsets = [0, 84], sizes = [16, 320], strides = [1, 1]} : vector<16x404xbf16> to vector<16x320xbf16>
    %27 = tpu.concatenate %2, %3, %4, %5, %6, %7, %8, %9, %10, %11, %12, %13, %14, %15, %16, %17 in 0 : vector<16x320xbf16>, vector<16x320xbf16>, vector<16x320xbf16>, vector<16x320xbf16>, vector<16x320xbf16>, vector<16x320xbf16>, vector<16x320xbf16>, vector<16x320xbf16>, vector<16x320xbf16>, vector<16x320xbf16>, vector<16x320xbf16>, vector<16x320xbf16>, vector<16x320xbf16>, vector<16x320xbf16>, vector<16x320xbf16>, vector<16x320xbf16> -> vector<256x320xbf16>
    %28 = tpu.concatenate %18, %19, %20, %21, %22, %23, %24, %25, %26 in 0 : vector<16x320xbf16>, vector<16x320xbf16>, vector<16x320xbf16>, vector<16x320xbf16>, vector<16x320xbf16>, vector<16x320xbf16>, vector<16x320xbf16>, vector<16x320xbf16>, vector<16x320xbf16> -> vector<144x320xbf16>
    %29 = tpu.concatenate %27, %28 in 0 : vector<256x320xbf16>, vector<144x320xbf16> -> vector<400x320xbf16>
    %c0_2 = arith.constant 0 : index
    %c0_3 = arith.constant 0 : index
    %30 = vector.load %arg2[%c0_2, %c0_3] : memref<3x400xbf16, #tpu.memory_space<vmem>>, vector<3x400xbf16>
    %cst = arith.constant dense<0.000000e+00> : vector<3x320xf32>
    %31 = tpu.matmul %30, %29, %cst {dimension_numbers = #tpu.dot_dimension_numbers<[1], [0], [0], [1], [0, 0, 1, 1], [], []>} : vector<3x400xbf16>, vector<400x320xbf16>, vector<3x320xf32> -> vector<3x320xf32>
    %c0_4 = arith.constant 0 : index
    %c0_5 = arith.constant 0 : index
    %32 = vector.load %arg3[%c0_4, %c0_5] : memref<3x1xf32, #tpu.memory_space<vmem>>, vector<3x1xf32>
    %33 = vector.broadcast %32 : vector<3x1xf32> to vector<3x320xf32>
    %34 = arith.mulf %31, %33 : vector<3x320xf32>
    %c0_6 = arith.constant 0 : index
    %c0_7 = arith.constant 0 : index
    %35 = vector.load %arg4[%c0_6, %c0_7] : memref<3x1xf32, #tpu.memory_space<vmem>>, vector<3x1xf32>
    %36 = vector.broadcast %35 : vector<3x1xf32> to vector<3x320xf32>
    %37 = arith.addf %34, %36 : vector<3x320xf32>
    %c0_8 = arith.constant 0 : index
    %c0_9 = arith.constant 0 : index
    %38 = vector.load %arg5[%c0_8, %c0_9] : memref<12x3xbf16, #tpu.memory_space<vmem>>, vector<12x3xbf16>
    %39 = arith.truncf %37 : vector<3x320xf32> to vector<3x320xbf16>
    %cst_10 = arith.constant dense<0.000000e+00> : vector<12x320xf32>
    %40 = tpu.matmul %38, %39, %cst_10 {dimension_numbers = #tpu.dot_dimension_numbers<[1], [0], [0], [1], [0, 0, 1, 1], [], []>} : vector<12x3xbf16>, vector<3x320xbf16>, vector<12x320xf32> -> vector<12x320xf32>
    %c0_11 = arith.constant 0 : index
    %c0_12 = arith.constant 0 : index
    %c0_13 = arith.constant 0 : index
    %41 = vector.load %arg6[%c0_11, %c0_12, %c0_13] : memref<1x12x320xf32, #tpu.memory_space<vmem>>, vector<1x12x320xf32>
    %42 = vector.shape_cast %41 : vector<1x12x320xf32> to vector<12x320xf32>
    %43 = vector.shape_cast %40 : vector<12x320xf32> to vector<1x12x320xf32>
    tpu.vector_store %arg6[%c0_11, %c0_12, %c0_13], %43 {strides = array<i32>} : memref<1x12x320xf32, #tpu.memory_space<vmem>>, vector<1x12x320xf32>,
    return
  }
  func.func @transform_0(%arg0: i32) -> (i32, i32, i32) {
    %c0_i32 = arith.constant 0 : i32
    %c0_i32_0 = arith.constant 0 : i32
    %c0_i32_1 = arith.constant 0 : i32
    return %arg0, %c0_i32, %c0_i32_0 : i32, i32, i32
  }
  func.func @transform_1(%arg0: i32) -> (i32, i32) {
    %c0_i32 = arith.constant 0 : i32
    %c0_i32_0 = arith.constant 0 : i32
    %c0_i32_1 = arith.constant 0 : i32
    return %c0_i32, %c0_i32_0 : i32, i32
  }
  func.func @transform_2(%arg0: i32) -> (i32, i32) {
    %c0_i32 = arith.constant 0 : i32
    %c0_i32_0 = arith.constant 0 : i32
    %c0_i32_1 = arith.constant 0 : i32
    return %c0_i32, %c0_i32_0 : i32, i32
  }
  func.func @transform_3(%arg0: i32) -> (i32, i32) {
    %c0_i32 = arith.constant 0 : i32
    %c0_i32_0 = arith.constant 0 : i32
    %c0_i32_1 = arith.constant 0 : i32
    return %c0_i32, %c0_i32_0 : i32, i32
  }
  func.func @transform_4(%arg0: i32) -> (i32, i32) {
    %c0_i32 = arith.constant 0 : i32
    %c0_i32_0 = arith.constant 0 : i32
    %c0_i32_1 = arith.constant 0 : i32
    return %c0_i32, %c0_i32_0 : i32, i32
  }
  func.func @transform_5(%arg0: i32) -> (i32, i32, i32) {
    %c0_i32 = arith.constant 0 : i32
    %c0_i32_0 = arith.constant 0 : i32
    %c0_i32_1 = arith.constant 0 : i32
    return %arg0, %c0_i32, %c0_i32_0 : i32, i32, i32
  }
}

</mosaic_0001>

<llo_original>
// kernel: image_decoder_forward.3
$region0: #{image_decoder_forward.3}
  #allocation0 [shape = 'u32[]', space=smem, size = 0x4, offset = 0x4, fixed_abs, tag = 'smem constant byte address 0x4 - core index']
  #allocation1 [shape = 'u32[144,128]{1,0:T(1,128)}', space=vmem, size = 0x12000, scoped, tag = 'internal scratch']
  %s0 = inlined_call_operand.vmem [shape: bf16[2,32,148], index: 0, kind: input, shape index: {}]
  %s1 = inlined_call_operand.hbm [shape: bf16[16,800], index: 1, kind: input, shape index: {}]
  %s2 = inlined_call_operand.vmem [shape: f32[16,1], index: 2, kind: input, shape index: {}]
  %s3 = inlined_call_operand.vmem [shape: f32[16,1], index: 3, kind: input, shape index: {}]
  %s4 = inlined_call_operand.vmem [shape: bf16[2,16,96], index: 4, kind: output, shape index: {}]
  %s5 = sld [smem:[#allocation0]]
  $region53: #{image_decoder_forward.3} parent=0
    _
  %s7 = ssub.s32 1, %s5
  %s8 = scalar_select 0, %s7, %s5
  $region1: #{image_decoder_forward.3} parent=0
    #allocation2 [shape = 'u8[28672]{0}', space=vmem, size = 0x7000, scoped, tag = 'input window, operand 1, single buffered']
    #allocation3 [shape = 's32[2]{0}', space=sflag, size = 0x8, scoped, tag = 'scoped memory for image_decoder_forward.3']
    %9 = vsyncpa [#allocation3], 0
    loop: start=0, step=1, limit=4
    $region2: #{image_decoder_forward.3} parent=1 // loop_pre_header
      _
    $region3: #{image_decoder_forward.3} parent=1 // loop_header
      %s11 = sphi 0, %s15
      %p12 = scmp.ge.s32.totalorder %s11, 4
      %s21 = sphi 0, %s23
      %s24 = sphi 0, %s21
      %s25 = sphi 0, %s24
      %s41 = sphi 0, %s25
      %s45 = sphi 0, %s45
      %s47 = sphi 0, %s45
      %s48 = sphi 0, %s47
      %s62 = sphi 0, %s48
      %s66 = sphi 0, %s66
      %s68 = sphi 0, %s66
      %s69 = sphi 0, %s68
      %s83 = sphi 0, %s69
      %s87 = sphi 0, %s87
      %s89 = sphi 0, %s87
      %s90 = sphi 0, %s89
      %s104 = sphi 0, %s90
      %s110 = sphi 0, %s112
      %s113 = sphi 0, %s110
      %s114 = sphi 0, %s113
      %s130 = sphi 0, %s114
    $region4: #{image_decoder_forward.3} parent=1 // loop_header_branch
      %14 = sbr.rel (%p12) target = $region8
    $region5: #{image_decoder_forward.3} parent=1 // loop_body
      %s16 = ssub.s32 %s11, 1
      %s17 = ssub.s32 %s11, 2
      %s18 = sadd.s32 %s11, 1
      %s19 = ssub.s32 %s11, %s18
      %p20 = scmp.eq.s32.totalorder %s19, 0
      %s22 = sadd.s32 %s21, 1
      %s23 = scalar_select %p20, %s21, %s22
      %p26 = pneg %p20
      %p27 = scmp.eq.s32.totalorder %s11, 1
      %p28 = por %p26, %p27
      %p29 = scmp.ne.s32.totalorder %s21, %s24
      %p30 = scmp.eq.s32.totalorder %s11, 0
      %p31 = por %p29, %p30
      %p32 = scmp.ne.s32.totalorder %s21, %s24
      %p33 = scmp.eq.s32.totalorder %s16, 1
      %p34 = por %p32, %p33
      %p35 = scmp.ne.s32.totalorder %s24, %s25
      %p36 = scmp.eq.s32.totalorder %s16, 0
      %p37 = por %p35, %p36
      %p38 = scmp.ne.s32.totalorder %s24, %s25
      %p39 = scmp.eq.s32.totalorder %s17, 1
      %p40 = por %p38, %p39
      %p42 = scmp.ne.s32.totalorder %s25, %s41
      %p43 = scmp.eq.s32.totalorder %s17, 0
      %p44 = por %p42, %p43
      %s46 = sadd.s32 %s45, 1
      %p49 = scmp.eq.s32.totalorder %s11, 1
      %p50 = scmp.ne.s32.totalorder %s45, %s47
      %p51 = scmp.eq.s32.totalorder %s11, 0
      %p52 = por %p50, %p51
      %p53 = scmp.ne.s32.totalorder %s45, %s47
      %p54 = scmp.eq.s32.totalorder %s16, 1
      %p55 = por %p53, %p54
      %p56 = scmp.ne.s32.totalorder %s47, %s48
      %p57 = scmp.eq.s32.totalorder %s16, 0
      %p58 = por %p56, %p57
      %p59 = scmp.ne.s32.totalorder %s47, %s48
      %p60 = scmp.eq.s32.totalorder %s17, 1
      %p61 = por %p59, %p60
      %p63 = scmp.ne.s32.totalorder %s48, %s62
      %p64 = scmp.eq.s32.totalorder %s17, 0
      %p65 = por %p63, %p64
      %s67 = sadd.s32 %s66, 1
      %p70 = scmp.eq.s32.totalorder %s11, 1
      %p71 = scmp.ne.s32.totalorder %s66, %s68
      %p72 = scmp.eq.s32.totalorder %s11, 0
      %p73 = por %p71, %p72
      %p74 = scmp.ne.s32.totalorder %s66, %s68
      %p75 = scmp.eq.s32.totalorder %s16, 1
      %p76 = por %p74, %p75
      %p77 = scmp.ne.s32.totalorder %s68, %s69
      %p78 = scmp.eq.s32.totalorder %s16, 0
      %p79 = por %p77, %p78
      %p80 = scmp.ne.s32.totalorder %s68, %s69
      %p81 = scmp.eq.s32.totalorder %s17, 1
      %p82 = por %p80, %p81
      %p84 = scmp.ne.s32.totalorder %s69, %s83
      %p85 = scmp.eq.s32.totalorder %s17, 0
      %p86 = por %p84, %p85
      %s88 = sadd.s32 %s87, 1
      %p91 = scmp.eq.s32.totalorder %s11, 1
      %p92 = scmp.ne.s32.totalorder %s87, %s89
      %p93 = scmp.eq.s32.totalorder %s11, 0
      %p94 = por %p92, %p93
      %p95 = scmp.ne.s32.totalorder %s87, %s89
      %p96 = scmp.eq.s32.totalorder %s16, 1
      %p97 = por %p95, %p96
      %p98 = scmp.ne.s32.totalorder %s89, %s90
      %p99 = scmp.eq.s32.totalorder %s16, 0
      %p100 = por %p98, %p99
      %p101 = scmp.ne.s32.totalorder %s89, %s90
      %p102 = scmp.eq.s32.totalorder %s17, 1
      %p103 = por %p101, %p102
      %p105 = scmp.ne.s32.totalorder %s90, %s104
      %p106 = scmp.eq.s32.totalorder %s17, 0
      %p107 = por %p105, %p106
      %s108 = ssub.s32 %s11, %s18
      %p109 = scmp.eq.s32.totalorder %s108, 0
      %s111 = sadd.s32 %s110, 1
      %s112 = scalar_select %p109, %s110, %s111
      %p115 = pneg %p109
      %p116 = scmp.eq.s32.totalorder %s11, 1
      %p117 = por %p115, %p116
      %p118 = scmp.ne.s32.totalorder %s110, %s113
      %p119 = scmp.eq.s32.totalorder %s11, 0
      %p120 = por %p118, %p119
      %p121 = scmp.ne.s32.totalorder %s110, %s113
      %p122 = scmp.eq.s32.totalorder %s16, 1
      %p123 = por %p121, %p122
      %p124 = scmp.ne.s32.totalorder %s113, %s114
      %p125 = scmp.eq.s32.totalorder %s16, 0
      %p126 = por %p124, %p125
      %p127 = scmp.ne.s32.totalorder %s113, %s114
      %p128 = scmp.eq.s32.totalorder %s17, 1
      %p129 = por %p127, %p128
      %p131 = scmp.ne.s32.totalorder %s114, %s130
      %p132 = scmp.eq.s32.totalorder %s17, 0
      %p133 = por %p131, %p132
      %p134 = scmp.le.s32.totalorder 1, %s11
      %p135 = scmp.lt.s32.totalorder %s11, 3
      %p136 = pnand %p134, %p135
      %p137 = pneg %p136
      // Predicated region
      $region9: #{image_decoder_forward.3} parent=5 // pred_check
        _
      $region10: #{image_decoder_forward.3} parent=5 // pred_check_branch
        %139 = sbr.rel (%p136) target = $region12
      $region11: #{image_decoder_forward.3} parent=5 // pred_region
        %s140 = ssub.s32 %s11, 1
        // Predicated region
        $region13: #{image_decoder_forward.3} parent=11 // pred_check
          %p141 = pneg %p58
        $region14: #{image_decoder_forward.3} parent=11 // pred_check_branch
          %143 = sbr.rel (%p141) target = $region16
        $region15: #{image_decoder_forward.3} parent=11 // pred_region
          %s145 = ssub.s32 896, 896
          %146 = vsyncadd [#allocation3], %s145
          %s147 = sshll.u32 [#allocation2], 4
          %s148 = int_to_ptr.vmem [resolvable:$true] %s147
          %153 = dma.hbm_to_vmem [thread:$0]  %s1, 896, %s148, [#allocation3], 448, 448, 28
        $region16: #{image_decoder_forward.3} parent=11 // pred_fallthru
          _
        // Predicated region
        $region17: #{image_decoder_forward.3} parent=11 // pred_check
          %p154 = pneg %p79
        $region18: #{image_decoder_forward.3} parent=11 // pred_check_branch
          %156 = sbr.rel (%p154) target = $region20
        $region19: #{image_decoder_forward.3} parent=11 // pred_region
          _
        $region20: #{image_decoder_forward.3} parent=11 // pred_fallthru
          _
        // Predicated region
        $region21: #{image_decoder_forward.3} parent=11 // pred_check
          %p157 = pneg %p100
        $region22: #{image_decoder_forward.3} parent=11 // pred_check_branch
          %159 = sbr.rel (%p157) target = $region24
        $region23: #{image_decoder_forward.3} parent=11 // pred_region
          _
        $region24: #{image_decoder_forward.3} parent=11 // pred_fallthru
          _
      $region12: #{image_decoder_forward.3} parent=5 // pred_fallthru
        _
      %p160 = scmp.lt.s32.totalorder %s11, 2
      // Predicated region
      $region25: #{image_decoder_forward.3} parent=5 // pred_check
        %p161 = pneg %p160
      $region26: #{image_decoder_forward.3} parent=5 // pred_check_branch
        %163 = sbr.rel (%p161) target = $region28
      $region27: #{image_decoder_forward.3} parent=5 // pred_region
        // Predicated region
        $region29: #{image_decoder_forward.3} parent=27 // pred_check
          %p164 = pneg %p31
        $region30: #{image_decoder_forward.3} parent=27 // pred_check_branch
          %166 = sbr.rel (%p164) target = $region32
        $region31: #{image_decoder_forward.3} parent=27 // pred_region
          %p167 = scmp.lt.s32.totalorder %s11, 1
          %s168 = scalar_select %p167, %s11, 1
          %s169 = smul.addr %s168, 8
          %s170 = smul.addr %s169, 4
          %s171 = scalar_lea.vmem %s0, %s170
        $region32: #{image_decoder_forward.3} parent=27 // pred_fallthru
          _
      $region28: #{image_decoder_forward.3} parent=5 // pred_fallthru
        _
      %p172 = scmp.le.s32.totalorder 1, %s11
      %p173 = scmp.lt.s32.totalorder %s11, 3
      %p174 = pnand %p172, %p173
      %p175 = pneg %p174
      // Predicated region
      $region33: #{image_decoder_forward.3} parent=5 // pred_check
        _
      $region34: #{image_decoder_forward.3} parent=5 // pred_check_branch
        %177 = sbr.rel (%p174) target = $region36
      $region35: #{image_decoder_forward.3} parent=5 // pred_region
        %s178 = ssub.s32 %s11, 1
        // Predicated region
        $region37: #{image_decoder_forward.3} parent=35 // pred_check
          %p179 = pneg %p58
        $region38: #{image_decoder_forward.3} parent=35 // pred_check_branch
          %181 = sbr.rel (%p179) target = $region40
        $region39: #{image_decoder_forward.3} parent=35 // pred_region
          %182 = dma.done [#allocation3], 896
        $region40: #{image_decoder_forward.3} parent=35 // pred_fallthru
          _
        %p183 = scmp.lt.s32.totalorder %s16, 1
        %s184 = scalar_select %p183, %s16, 1
        %s185 = smul.addr %s184, 8
        %s186 = smul.addr %s185, 4
        %s187 = scalar_lea.vmem %s0, %s186
        %p188 = pneg %p37
        %p189 = pneg %p34
        %p190 = pneg %p58
        %p191 = pneg %p55
        %p192 = pneg %p79
        %p193 = pneg %p76
        %p194 = pneg %p100
        %p195 = pneg %p97
        %p196 = pneg %p126
        %p197 = pneg %p123
        %p198 = scmp.lt.s32.totalorder %s16, 1
        %s199 = scalar_select %p198, %s16, 1
        %s200 = smul.addr %s199, 2
        %s201 = smul.addr %s200, 4
        %s202 = scalar_lea.vmem %s4, %s201
        %p203 = scmp.lt.s32.totalorder %s16, 1
        %s204 = scalar_select %p203, %s16, 1
        %s205 = smul.addr %s204, 8
        %s206 = smul.addr %s205, 4
        %s207 = scalar_lea.vmem %s0, %s206
        %p208 = scmp.lt.s32.totalorder %s16, 1
        %s209 = scalar_select %p208, %s16, 1
        %s210 = smul.addr %s209, 2
        %s211 = smul.addr %s210, 4
        %s212 = scalar_lea.vmem %s4, %s211
        %v214 = vld [vmem:[%s207] sm:$0xff]
        %v215 = vld [vmem:[%s207 + $0x8] sm:$0xff]
        %v216 = vld [vmem:[%s207 + $0x10] sm:$0xff]
        %v217 = vld [vmem:[%s207 + $0x18] sm:$0xff]
        %v222 = vunpack.c.l.b16 %v214
        %v223 = vunpack.c.l.b16 %v215
        %v224 = vunpack.c.l.b16 %v216
        %v225 = vunpack.c.l.b16 %v217
        %v226 = vpack.c.b16 %v223, %v222
        %v227 = vpack.c.b16 %v225, %v224
        %230 = vrot.lane.b32.xlu0 %v226, 127
        %v231 = vpop.permute.xlu0 %230
        %232 = vrot.lane.b32.xlu0 %v227, 127
        %v233 = vpop.permute.xlu0 %232
        %236 = vrot.lane.b32.xlu0 %v226, 126
        %v237 = vpop.permute.xlu0 %236
        %238 = vrot.lane.b32.xlu0 %v227, 126
        %v239 = vpop.permute.xlu0 %238
        %242 = vrot.lane.b32.xlu0 %v226, 125
        %v243 = vpop.permute.xlu0 %242
        %244 = vrot.lane.b32.xlu0 %v227, 125
        %v245 = vpop.permute.xlu0 %244
        %248 = vrot.lane.b32.xlu0 %v226, 124
        %v249 = vpop.permute.xlu0 %248
        %250 = vrot.lane.b32.xlu0 %v227, 124
        %v251 = vpop.permute.xlu0 %250
        %254 = vrot.lane.b32.xlu0 %v226, 116
        %v255 = vpop.permute.xlu0 %254
        %256 = vrot.lane.b32.xlu0 %v227, 116
        %v257 = vpop.permute.xlu0 %256
        %260 = vrot.lane.b32.xlu0 %v226, 115
        %v261 = vpop.permute.xlu0 %260
        %262 = vrot.lane.b32.xlu0 %v227, 115
        %v263 = vpop.permute.xlu0 %262
        %266 = vrot.lane.b32.xlu0 %v226, 114
        %v267 = vpop.permute.xlu0 %266
        %268 = vrot.lane.b32.xlu0 %v227, 114
        %v269 = vpop.permute.xlu0 %268
        %272 = vrot.lane.b32.xlu0 %v226, 113
        %v273 = vpop.permute.xlu0 %272
        %274 = vrot.lane.b32.xlu0 %v227, 113
        %v275 = vpop.permute.xlu0 %274
        %278 = vrot.lane.b32.xlu0 %v226, 112
        %v279 = vpop.permute.xlu0 %278
        %280 = vrot.lane.b32.xlu0 %v227, 112
        %v281 = vpop.permute.xlu0 %280
        %284 = vrot.lane.b32.xlu0 %v226, 104
        %v285 = vpop.permute.xlu0 %284
        %286 = vrot.lane.b32.xlu0 %v227, 104
        %v287 = vpop.permute.xlu0 %286
        %290 = vrot.lane.b32.xlu0 %v226, 103
        %v291 = vpop.permute.xlu0 %290
        %292 = vrot.lane.b32.xlu0 %v227, 103
        %v293 = vpop.permute.xlu0 %292
        %296 = vrot.lane.b32.xlu0 %v226, 102
        %v297 = vpop.permute.xlu0 %296
        %298 = vrot.lane.b32.xlu0 %v227, 102
        %v299 = vpop.permute.xlu0 %298
        %302 = vrot.lane.b32.xlu0 %v226, 101
        %v303 = vpop.permute.xlu0 %302
        %304 = vrot.lane.b32.xlu0 %v227, 101
        %v305 = vpop.permute.xlu0 %304
        %308 = vrot.lane.b32.xlu0 %v226, 100
        %v309 = vpop.permute.xlu0 %308
        %310 = vrot.lane.b32.xlu0 %v227, 100
        %v311 = vpop.permute.xlu0 %310
        %v314 = vunpack.c.h.b16 %v214
        %v315 = vunpack.c.h.b16 %v215
        %v316 = vunpack.c.h.b16 %v216
        %v317 = vunpack.c.h.b16 %v217
        %v318 = vpack.c.b16 %v315, %v314
        %v319 = vpack.c.b16 %v317, %v316
        %320 = vrot.lane.b32.xlu0 %v226, 92
        %v321 = vpop.permute.xlu0 %320
        %322 = vrot.lane.b32.xlu0 %v318, 92
        %v323 = vpop.permute.xlu0 %322
        %324 = vrot.lane.b32.xlu0 %v227, 92
        %v325 = vpop.permute.xlu0 %324
        %326 = vrot.lane.b32.xlu0 %v319, 92
        %v327 = vpop.permute.xlu0 %326
        %vm328 = vcmask 752640
        %v329 = vsel %vm328, %v321, %v323
        %v330 = vsel %vm328, %v325, %v327
        %333 = vrot.lane.b32.xlu0 %v318, 127
        %v334 = vpop.permute.xlu0 %333
        %335 = vrot.lane.b32.xlu0 %v319, 127
        %v336 = vpop.permute.xlu0 %335
        %vm337 = vcmask 1039360
        %v338 = vsel %vm337, %v231, %v334
        %v339 = vsel %vm337, %v233, %v336
        %340 = vrot.lane.b32.xlu0 %v318, 126
        %v341 = vpop.permute.xlu0 %340
        %342 = vrot.lane.b32.xlu0 %v319, 126
        %v343 = vpop.permute.xlu0 %342
        %vm344 = vcmask 1031168
        %v345 = vsel %vm344, %v237, %v341
        %v346 = vsel %vm344, %v239, %v343
        %347 = vrot.lane.b32.xlu0 %v318, 125
        %v348 = vpop.permute.xlu0 %347
        %349 = vrot.lane.b32.xlu0 %v319, 125
        %v350 = vpop.permute.xlu0 %349
        %vm351 = vcmask 1022976
        %v352 = vsel %vm351, %v243, %v348
        %v353 = vsel %vm351, %v245, %v350
        %354 = vrot.lane.b32.xlu0 %v226, 117
        %v355 = vpop.permute.xlu0 %354
        %356 = vrot.lane.b32.xlu0 %v318, 117
        %v357 = vpop.permute.xlu0 %356
        %358 = vrot.lane.b32.xlu0 %v227, 117
        %v359 = vpop.permute.xlu0 %358
        %360 = vrot.lane.b32.xlu0 %v319, 117
        %v361 = vpop.permute.xlu0 %360
        %vm362 = vcmask 957440
        %v363 = vsel %vm362, %v355, %v357
        %v364 = vsel %vm362, %v359, %v361
        %365 = vrot.lane.b32.xlu0 %v318, 116
        %v366 = vpop.permute.xlu0 %365
        %367 = vrot.lane.b32.xlu0 %v319, 116
        %v368 = vpop.permute.xlu0 %367
        %vm369 = vcmask 949248
        %v370 = vsel %vm369, %v255, %v366
        %v371 = vsel %vm369, %v257, %v368
        %372 = vrot.lane.b32.xlu0 %v318, 115
        %v373 = vpop.permute.xlu0 %372
        %374 = vrot.lane.b32.xlu0 %v319, 115
        %v375 = vpop.permute.xlu0 %374
        %vm376 = vcmask 941056
        %v377 = vsel %vm376, %v261, %v373
        %v378 = vsel %vm376, %v263, %v375
        %379 = vrot.lane.b32.xlu0 %v318, 114
        %v380 = vpop.permute.xlu0 %379
        %381 = vrot.lane.b32.xlu0 %v319, 114
        %v382 = vpop.permute.xlu0 %381
        %vm383 = vcmask 932864
        %v384 = vsel %vm383, %v267, %v380
        %v385 = vsel %vm383, %v269, %v382
        %386 = vrot.lane.b32.xlu0 %v318, 113
        %v387 = vpop.permute.xlu0 %386
        %388 = vrot.lane.b32.xlu0 %v319, 113
        %v389 = vpop.permute.xlu0 %388
        %vm390 = vcmask 924672
        %v391 = vsel %vm390, %v273, %v387
        %v392 = vsel %vm390, %v275, %v389
        %393 = vrot.lane.b32.xlu0 %v226, 91
        %v394 = vpop.permute.xlu0 %393
        %395 = vrot.lane.b32.xlu0 %v318, 91
        %v396 = vpop.permute.xlu0 %395
        %397 = vrot.lane.b32.xlu0 %v227, 91
        %v398 = vpop.permute.xlu0 %397
        %399 = vrot.lane.b32.xlu0 %v319, 91
        %v400 = vpop.permute.xlu0 %399
        %401 = vrot.lane.b32.xlu0 %v338, 91
        %v402 = vpop.permute.xlu0 %401
        %403 = vrot.lane.b32.xlu0 %v334, 91
        %v404 = vpop.permute.xlu0 %403
        %405 = vrot.lane.b32.xlu0 %v339, 91
        %v406 = vpop.permute.xlu0 %405
        %407 = vrot.lane.b32.xlu0 %v336, 91
        %v408 = vpop.permute.xlu0 %407
        %409 = vrot.lane.b32.xlu0 %v345, 91
        %v410 = vpop.permute.xlu0 %409
        %411 = vrot.lane.b32.xlu0 %v341, 91
        %v412 = vpop.permute.xlu0 %411
        %413 = vrot.lane.b32.xlu0 %v346, 91
        %v414 = vpop.permute.xlu0 %413
        %415 = vrot.lane.b32.xlu0 %v343, 91
        %v416 = vpop.permute.xlu0 %415
        %417 = vrot.lane.b32.xlu0 %v352, 91
        %v418 = vpop.permute.xlu0 %417
        %419 = vrot.lane.b32.xlu0 %v348, 91
        %v420 = vpop.permute.xlu0 %419
        %421 = vrot.lane.b32.xlu0 %v353, 91
        %v422 = vpop.permute.xlu0 %421
        %423 = vrot.lane.b32.xlu0 %v350, 91
        %v424 = vpop.permute.xlu0 %423
        %425 = vrot.lane.b32.xlu0 %v363, 91
        %v426 = vpop.permute.xlu0 %425
        %427 = vrot.lane.b32.xlu0 %v357, 91
        %v428 = vpop.permute.xlu0 %427
        %429 = vrot.lane.b32.xlu0 %v364, 91
        %v430 = vpop.permute.xlu0 %429
        %431 = vrot.lane.b32.xlu0 %v361, 91
        %v432 = vpop.permute.xlu0 %431
        %433 = vrot.lane.b32.xlu0 %v370, 91
        %v434 = vpop.permute.xlu0 %433
        %435 = vrot.lane.b32.xlu0 %v366, 91
        %v436 = vpop.permute.xlu0 %435
        %437 = vrot.lane.b32.xlu0 %v371, 91
        %v438 = vpop.permute.xlu0 %437
        %439 = vrot.lane.b32.xlu0 %v368, 91
        %v440 = vpop.permute.xlu0 %439
        %441 = vrot.lane.b32.xlu0 %v377, 91
        %v442 = vpop.permute.xlu0 %441
        %443 = vrot.lane.b32.xlu0 %v373, 91
        %v444 = vpop.permute.xlu0 %443
        %445 = vrot.lane.b32.xlu0 %v378, 91
        %v446 = vpop.permute.xlu0 %445
        %447 = vrot.lane.b32.xlu0 %v375, 91
        %v448 = vpop.permute.xlu0 %447
        %449 = vrot.lane.b32.xlu0 %v384, 91
        %v450 = vpop.permute.xlu0 %449
        %451 = vrot.lane.b32.xlu0 %v380, 91
        %v452 = vpop.permute.xlu0 %451
        %453 = vrot.lane.b32.xlu0 %v385, 91
        %v454 = vpop.permute.xlu0 %453
        %455 = vrot.lane.b32.xlu0 %v382, 91
        %v456 = vpop.permute.xlu0 %455
        %457 = vrot.lane.b32.xlu0 %v391, 91
        %v458 = vpop.permute.xlu0 %457
        %459 = vrot.lane.b32.xlu0 %v387, 91
        %v460 = vpop.permute.xlu0 %459
        %461 = vrot.lane.b32.xlu0 %v392, 91
        %v462 = vpop.permute.xlu0 %461
        %463 = vrot.lane.b32.xlu0 %v389, 91
        %v464 = vpop.permute.xlu0 %463
        %vm465 = vcmask 744448
        %v466 = vsel %vm465, %v394, %v396
        %v467 = vsel %vm465, %v398, %v400
        %v468 = vsel %vm465, %v402, %v404
        %v469 = vsel %vm465, %v406, %v408
        %v470 = vsel %vm465, %v410, %v412
        %v471 = vsel %vm465, %v414, %v416
        %v472 = vsel %vm465, %v418, %v420
        %v473 = vsel %vm465, %v422, %v424
        %v474 = vsel %vm465, %v426, %v428
        %v475 = vsel %vm465, %v430, %v432
        %v476 = vsel %vm465, %v434, %v436
        %v477 = vsel %vm465, %v438, %v440
        %v478 = vsel %vm465, %v442, %v444
        %v479 = vsel %vm465, %v446, %v448
        %v480 = vsel %vm465, %v450, %v452
        %v481 = vsel %vm465, %v454, %v456
        %v482 = vsel %vm465, %v458, %v460
        %v483 = vsel %vm465, %v462, %v464
        %v502 = vld [vmem:[#allocation2] sm:$0xff]
        %v503 = vld [vmem:[#allocation2 + $0x8] sm:$0xff]
        %v504 = vld [vmem:[#allocation2 + $0x10] sm:$0xff]
        %v505 = vld [vmem:[#allocation2 + $0x18] sm:$0xf]
        %v506 = vld [vmem:[#allocation2 + $0x1c] sm:$0xff]
        %v507 = vld [vmem:[#allocation2 + $0x24] sm:$0xff]
        %v508 = vld [vmem:[#allocation2 + $0x2c] sm:$0xff]
        %v509 = vld [vmem:[#allocation2 + $0x34] sm:$0xf]
        %v518 = vunpack.c.l.b16 %v502
        %v519 = vunpack.c.h.b16 %v502
        %v520 = vunpack.c.l.b16 %v503
        %v521 = vunpack.c.h.b16 %v503
        %v522 = vunpack.c.l.b16 %v504
        %v523 = vunpack.c.h.b16 %v504
        %v524 = vunpack.c.l.b16 %v505
        %v525 = vunpack.c.l.b16 %v506
        %v526 = vunpack.c.h.b16 %v506
        %v527 = vunpack.c.l.b16 %v507
        %v528 = vunpack.c.h.b16 %v507
        %v529 = vunpack.c.l.b16 %v508
        %v530 = vunpack.c.h.b16 %v508
        %v531 = vunpack.c.l.b16 %v509
        %v532 = vpack.c.b16 %v525, %v518
        %v533 = vpack.c.b16 %v526, %v519
        %v534 = vpack.c.b16 %v527, %v520
        %v535 = vpack.c.b16 %v528, %v521
        %v536 = vpack.c.b16 %v529, %v522
        %v537 = vpack.c.b16 %v530, %v523
        %v538 = vpack.c.b16 %v531, %v524
        %vm545 = vcmask 261120
        %v547 = vsel %vm545, %v538, 0
        %549 = vmatprep.subr.bf16.mxu0 0
        %550 = vmatpush1.bf16.msra.mxu0 %v245
        %551 = vmatprep.subr.bf16.mxu0 0
        %552 = vmatpush1.bf16.msra.mxu0 %v243
        %553 = vmatprep.subr.bf16.mxu0 0
        %554 = vmatpush1.bf16.msra.mxu0 %v239
        %555 = vmatprep.subr.bf16.mxu0 0
        %556 = vmatpush1.bf16.msra.mxu0 %v237
        %557 = vmatprep.subr.bf16.mxu0 0
        %558 = vmatpush1.bf16.msra.mxu0 %v233
        %559 = vmatprep.subr.bf16.mxu0 0
        %560 = vmatpush1.bf16.msra.mxu0 %v231
        %561 = vmatprep.subr.bf16.mxu0 0
        %562 = vmatpush1.bf16.msra.mxu0 %v227
        %563 = vmatprep.subr.bf16.mxu0 0
        %564 = vmatpush1.bf16.msra.mxu0 %v226
        %565 = vmatprep.subr.bf16.mxu0 0
        %566 = vmatpush2.bf16.msra.mxu0 %v269
        %567 = vmatprep.subr.bf16.mxu0 0
        %568 = vmatpush2.bf16.msra.mxu0 %v267
        %569 = vmatprep.subr.bf16.mxu0 0
        %570 = vmatpush2.bf16.msra.mxu0 %v263
        %571 = vmatprep.subr.bf16.mxu0 0
        %572 = vmatpush2.bf16.msra.mxu0 %v261
        %573 = vmatprep.subr.bf16.mxu0 0
        %574 = vmatpush2.bf16.msra.mxu0 %v257
        %575 = vmatprep.subr.bf16.mxu0 0
        %576 = vmatpush2.bf16.msra.mxu0 %v255
        %577 = vmatprep.subr.bf16.mxu0 0
        %578 = vmatpush2.bf16.msra.mxu0 %v251
        %579 = vmatprep.subr.bf16.mxu0 0
        %580 = vmatpush2.bf16.msra.mxu0 %v249
        %581 = vmatprep.mubr.bf16.mxu0 %v533
        %582 = vmatmul.mubr.bf16.gmra.mxu0 %v532
        %v583 = vpop.f32.mrf.mxu0
        %v584 = vadd.f32 0.0, %v583
        %v585 = vpop.f32.mrf.mxu0
        %v586 = vpop.f32.mrf.mxu0
        %v587 = vadd.f32 0.0, %v586
        %v588 = vpop.f32.mrf.mxu0
        %589 = vdwg.mxu0
        %590 = vmatprep.subr.bf16.mxu0 0
        %591 = vmatpush1.bf16.msra.mxu0 %v293
        %592 = vmatprep.subr.bf16.mxu0 0
        %593 = vmatpush1.bf16.msra.mxu0 %v291
        %594 = vmatprep.subr.bf16.mxu0 0
        %595 = vmatpush1.bf16.msra.mxu0 %v287
        %596 = vmatprep.subr.bf16.mxu0 0
        %597 = vmatpush1.bf16.msra.mxu0 %v285
        %598 = vmatprep.subr.bf16.mxu0 0
        %599 = vmatpush1.bf16.msra.mxu0 %v281
        %600 = vmatprep.subr.bf16.mxu0 0
        %601 = vmatpush1.bf16.msra.mxu0 %v279
        %602 = vmatprep.subr.bf16.mxu0 0
        %603 = vmatpush1.bf16.msra.mxu0 %v275
        %604 = vmatprep.subr.bf16.mxu0 0
        %605 = vmatpush1.bf16.msra.mxu0 %v273
        %606 = vmatprep.subr.bf16.mxu0 0
        %607 = vmatpush2.bf16.msra.mxu0 %v330
        %608 = vmatprep.subr.bf16.mxu0 0
        %609 = vmatpush2.bf16.msra.mxu0 %v329
        %610 = vmatprep.subr.bf16.mxu0 0
        %611 = vmatpush2.bf16.msra.mxu0 %v311
        %612 = vmatprep.subr.bf16.mxu0 0
        %613 = vmatpush2.bf16.msra.mxu0 %v309
        %614 = vmatprep.subr.bf16.mxu0 0
        %615 = vmatpush2.bf16.msra.mxu0 %v305
        %616 = vmatprep.subr.bf16.mxu0 0
        %617 = vmatpush2.bf16.msra.mxu0 %v303
        %618 = vmatprep.subr.bf16.mxu0 0
        %619 = vmatpush2.bf16.msra.mxu0 %v299
        %620 = vmatprep.subr.bf16.mxu0 0
        %621 = vmatpush2.bf16.msra.mxu0 %v297
        %622 = vmatprep.mubr.bf16.mxu0 %v535
        %623 = vmatmul.mubr.bf16.gmra.mxu0 %v534
        %v624 = vpop.f32.mrf.mxu0
        %v625 = vadd.f32 %v584, %v624
        %v626 = vpop.f32.mrf.mxu0
        %v627 = vpop.f32.mrf.mxu0
        %v628 = vadd.f32 %v587, %v627
        %v629 = vpop.f32.mrf.mxu0
        %630 = vdwg.mxu0
        %631 = vmatprep.subr.bf16.mxu0 0
        %632 = vmatpush1.bf16.msra.mxu0 %v473
        %633 = vmatprep.subr.bf16.mxu0 0
        %634 = vmatpush1.bf16.msra.mxu0 %v472
        %635 = vmatprep.subr.bf16.mxu0 0
        %636 = vmatpush1.bf16.msra.mxu0 %v471
        %637 = vmatprep.subr.bf16.mxu0 0
        %638 = vmatpush1.bf16.msra.mxu0 %v470
        %639 = vmatprep.subr.bf16.mxu0 0
        %640 = vmatpush1.bf16.msra.mxu0 %v469
        %641 = vmatprep.subr.bf16.mxu0 0
        %642 = vmatpush1.bf16.msra.mxu0 %v468
        %643 = vmatprep.subr.bf16.mxu0 0
        %644 = vmatpush1.bf16.msra.mxu0 %v467
        %645 = vmatprep.subr.bf16.mxu0 0
        %646 = vmatpush1.bf16.msra.mxu0 %v466
        %647 = vmatprep.subr.bf16.mxu0 0
        %648 = vmatpush2.bf16.msra.mxu0 %v481
        %649 = vmatprep.subr.bf16.mxu0 0
        %650 = vmatpush2.bf16.msra.mxu0 %v480
        %651 = vmatprep.subr.bf16.mxu0 0
        %652 = vmatpush2.bf16.msra.mxu0 %v479
        %653 = vmatprep.subr.bf16.mxu0 0
        %654 = vmatpush2.bf16.msra.mxu0 %v478
        %655 = vmatprep.subr.bf16.mxu0 0
        %656 = vmatpush2.bf16.msra.mxu0 %v477
        %657 = vmatprep.subr.bf16.mxu0 0
        %658 = vmatpush2.bf16.msra.mxu0 %v476
        %659 = vmatprep.subr.bf16.mxu0 0
        %660 = vmatpush2.bf16.msra.mxu0 %v475
        %661 = vmatprep.subr.bf16.mxu0 0
        %662 = vmatpush2.bf16.msra.mxu0 %v474
        %663 = vmatprep.mubr.bf16.mxu0 %v537
        %664 = vmatmul.mubr.bf16.gmra.mxu0 %v536
        %v665 = vpop.f32.mrf.mxu0
        %v666 = vadd.f32 %v625, %v665
        %v667 = vpop.f32.mrf.mxu0
        %v668 = vpop.f32.mrf.mxu0
        %v669 = vadd.f32 %v628, %v668
        %v670 = vpop.f32.mrf.mxu0
        %671 = vdwg.mxu0
        %672 = vmatprep.subr.bf16.mxu0 0
        %673 = vmatpush1.bf16.msra.mxu0 0
        %674 = vmatprep.subr.bf16.mxu0 0
        %675 = vmatpush1.bf16.msra.mxu0 0
        %676 = vmatprep.subr.bf16.mxu0 0
        %677 = vmatpush1.bf16.msra.mxu0 0
        %678 = vmatprep.subr.bf16.mxu0 0
        %679 = vmatpush1.bf16.msra.mxu0 0
        %680 = vmatprep.subr.bf16.mxu0 0
        %681 = vmatpush1.bf16.msra.mxu0 0
        %682 = vmatprep.subr.bf16.mxu0 0
        %683 = vmatpush1.bf16.msra.mxu0 0
        %684 = vmatprep.subr.bf16.mxu0 0
        %685 = vmatpush1.bf16.msra.mxu0 %v483
        %686 = vmatprep.subr.bf16.mxu0 0
        %687 = vmatpush1.bf16.msra.mxu0 %v482
        %688 = vmatprep.subr.bf16.mxu0 0
        %689 = vmatpush2.bf16.msra.mxu0 0
        %690 = vmatprep.subr.bf16.mxu0 0
        %691 = vmatpush2.bf16.msra.mxu0 0
        %692 = vmatprep.subr.bf16.mxu0 0
        %693 = vmatpush2.bf16.msra.mxu0 0
        %694 = vmatprep.subr.bf16.mxu0 0
        %695 = vmatpush2.bf16.msra.mxu0 0
        %696 = vmatprep.subr.bf16.mxu0 0
        %697 = vmatpush2.bf16.msra.mxu0 0
        %698 = vmatprep.subr.bf16.mxu0 0
        %699 = vmatpush2.bf16.msra.mxu0 0
        %700 = vmatprep.subr.bf16.mxu0 0
        %701 = vmatpush2.bf16.msra.mxu0 0
        %702 = vmatprep.subr.bf16.mxu0 0
        %703 = vmatpush2.bf16.msra.mxu0 0
        %704 = vmatprep.mubr.bf16.mxu0 0
        %705 = vmatmul.mubr.bf16.gmra.mxu0 %v547
        %v706 = vpop.f32.mrf.mxu0
        %v707 = vadd.f32 %v666, %v706
        %v708 = vpop.f32.mrf.mxu0
        %v709 = vpop.f32.mrf.mxu0
        %v710 = vadd.f32 %v669, %v709
        %v711 = vpop.f32.mrf.mxu0
        %712 = vdwg.mxu0
        %v713 = vld [vmem:[%s2] sm:$0xff]
        %v714 = vld [vmem:[%s2 + $0x8] sm:$0xff]
        %716 = vset.pattern.permute.xlu0 0
        %717 = vperm.xlu0 %716, %v713
        %v718 = vpop.permute.xlu0 %717
        %721 = vset.pattern.permute.xlu0 0
        %722 = vperm.xlu0 %721, %v714
        %v723 = vpop.permute.xlu0 %722
        %v725 = vmul.f32 %v707, %v718
        %v726 = vmul.f32 %v710, %v723
        %v727 = vld [vmem:[%s3] sm:$0xff]
        %v728 = vld [vmem:[%s3 + $0x8] sm:$0xff]
        %730 = vset.pattern.permute.xlu0 0
        %731 = vperm.xlu0 %730, %v727
        %v732 = vpop.permute.xlu0 %731
        %735 = vset.pattern.permute.xlu0 0
        %736 = vperm.xlu0 %735, %v728
        %v737 = vpop.permute.xlu0 %736
        %v739 = vadd.f32 %v725, %v732
        %v740 = vadd.f32 %v726, %v737
        %vm741 = vcmp.ge.f32.partialorder %v739, 0.0
        %vm742 = vcmp.ge.f32.partialorder %v740, 0.0
        %v743 = vmul.f32 %v739, 0.01
        %v744 = vmul.f32 %v740, 0.01
        %v745 = vsel %vm741, %v739, %v743
        %v746 = vsel %vm742, %v740, %v744
        %v747 = vpack.c.bf16 %v746, %v745
        %v749 = vunpack.c.l.b16 %v747
        %v750 = vunpack.c.h.b16 %v747
        %v751 = vpack.c.b16 %v749, %v749
        %v752 = vpack.c.b16 %v750, %v750
        %vm755 = vcmask 781312
        %756 = vst.msk [vmem:[%s212] sm:$0xf] %vm755, %v751
        %757 = vst.msk [vmem:[%s212 + $0x4] sm:$0xf] %vm755, %v752
        %p758 = scmp.lt.s32.totalorder %s16, 1
        %s759 = scalar_select %p758, %s16, 1
        %s760 = smul.addr %s759, 2
        %s761 = smul.addr %s760, 4
        %s762 = scalar_lea.vmem %s4, %s761
        // Predicated region
        $region41: #{image_decoder_forward.3} parent=35 // pred_check
          %p763 = pneg %p123
        $region42: #{image_decoder_forward.3} parent=35 // pred_check_branch
          %765 = sbr.rel (%p763) target = $region44
        $region43: #{image_decoder_forward.3} parent=35 // pred_region
          _
        $region44: #{image_decoder_forward.3} parent=35 // pred_fallthru
          _
      $region36: #{image_decoder_forward.3} parent=5 // pred_fallthru
        _
      %p766 = scmp.le.s32.totalorder 2, %s11
      // Predicated region
      $region45: #{image_decoder_forward.3} parent=5 // pred_check
        %p767 = pneg %p766
      $region46: #{image_decoder_forward.3} parent=5 // pred_check_branch
        %769 = sbr.rel (%p767) target = $region48
      $region47: #{image_decoder_forward.3} parent=5 // pred_region
        %s770 = ssub.s32 %s11, 2
        // Predicated region
        $region49: #{image_decoder_forward.3} parent=47 // pred_check
          %p771 = pneg %p129
        $region50: #{image_decoder_forward.3} parent=47 // pred_check_branch
          %773 = sbr.rel (%p771) target = $region52
        $region51: #{image_decoder_forward.3} parent=47 // pred_region
          %p774 = scmp.lt.s32.totalorder %s17, 1
          %s775 = scalar_select %p774, %s17, 1
          %s776 = smul.addr %s775, 2
          %s777 = smul.addr %s776, 4
          %s778 = scalar_lea.vmem %s4, %s777
        $region52: #{image_decoder_forward.3} parent=47 // pred_fallthru
          _
      $region48: #{image_decoder_forward.3} parent=5 // pred_fallthru
        _
    $region6: #{image_decoder_forward.3} parent=1 // loop_footer
      %s15 = sadd.s32 1, %s11
    $region7: #{image_decoder_forward.3} parent=1 // loop_footer_branch
      %10 = sbr.rel target = $region3
    $region8: #{image_decoder_forward.3} parent=1 // loop_exit
      _
    %779 = vsyncpa [#allocation3], 1
    %s780 = scalar_lea.sflag [#allocation3], 1
    %781 = vsyncpa %s780, 1

// kernel: image_decoder_forward.4
$region0: #{image_decoder_forward.4}
  #allocation0 [shape = 'u32[]', space=smem, size = 0x4, offset = 0x4, fixed_abs, tag = 'smem constant byte address 0x4 - core index']
  #allocation1 [shape = 'u32[144,128]{1,0:T(1,128)}', space=vmem, size = 0x12000, scoped, tag = 'internal scratch']
  %s0 = inlined_call_operand.vmem [shape: bf16[2,16,148], index: 0, kind: input, shape index: {}]
  %s1 = inlined_call_operand.hbm [shape: bf16[8,400], index: 1, kind: input, shape index: {}]
  %s2 = inlined_call_operand.vmem [shape: f32[8,1], index: 2, kind: input, shape index: {}]
  %s3 = inlined_call_operand.vmem [shape: f32[8,1], index: 3, kind: input, shape index: {}]
  %s4 = inlined_call_operand.vmem [shape: bf16[32,8], index: 4, kind: input, shape index: {}]
  %s5 = inlined_call_operand.vmem [shape: bf16[2,32,96], index: 5, kind: output, shape index: {}]
  %s6 = sld [smem:[#allocation0]]
  $region57: #{image_decoder_forward.4} parent=0
    _
  %s8 = ssub.s32 1, %s6
  %s9 = scalar_select 0, %s8, %s6
  $region1: #{image_decoder_forward.4} parent=0
    #allocation2 [shape = 'u8[8192]{0}', space=vmem, size = 0x2000, scoped, tag = 'input window, operand 1, single buffered']
    #allocation3 [shape = 's32[2]{0}', space=sflag, size = 0x8, scoped, tag = 'scoped memory for image_decoder_forward.4']
    %10 = vsyncpa [#allocation3], 0
    loop: start=0, step=1, limit=4
    $region2: #{image_decoder_forward.4} parent=1 // loop_pre_header
      _
    $region3: #{image_decoder_forward.4} parent=1 // loop_header
      %s12 = sphi 0, %s16
      %p13 = scmp.ge.s32.totalorder %s12, 4
      %s22 = sphi 0, %s24
      %s25 = sphi 0, %s22
      %s26 = sphi 0, %s25
      %s42 = sphi 0, %s26
      %s46 = sphi 0, %s46
      %s48 = sphi 0, %s46
      %s49 = sphi 0, %s48
      %s63 = sphi 0, %s49
      %s67 = sphi 0, %s67
      %s69 = sphi 0, %s67
      %s70 = sphi 0, %s69
      %s84 = sphi 0, %s70
      %s88 = sphi 0, %s88
      %s90 = sphi 0, %s88
      %s91 = sphi 0, %s90
      %s105 = sphi 0, %s91
      %s109 = sphi 0, %s109
      %s111 = sphi 0, %s109
      %s112 = sphi 0, %s111
      %s126 = sphi 0, %s112
      %s132 = sphi 0, %s134
      %s135 = sphi 0, %s132
      %s136 = sphi 0, %s135
      %s152 = sphi 0, %s136
    $region4: #{image_decoder_forward.4} parent=1 // loop_header_branch
      %15 = sbr.rel (%p13) target = $region8
    $region5: #{image_decoder_forward.4} parent=1 // loop_body
      %s17 = ssub.s32 %s12, 1
      %s18 = ssub.s32 %s12, 2
      %s19 = sadd.s32 %s12, 1
      %s20 = ssub.s32 %s12, %s19
      %p21 = scmp.eq.s32.totalorder %s20, 0
      %s23 = sadd.s32 %s22, 1
      %s24 = scalar_select %p21, %s22, %s23
      %p27 = pneg %p21
      %p28 = scmp.eq.s32.totalorder %s12, 1
      %p29 = por %p27, %p28
      %p30 = scmp.ne.s32.totalorder %s22, %s25
      %p31 = scmp.eq.s32.totalorder %s12, 0
      %p32 = por %p30, %p31
      %p33 = scmp.ne.s32.totalorder %s22, %s25
      %p34 = scmp.eq.s32.totalorder %s17, 1
      %p35 = por %p33, %p34
      %p36 = scmp.ne.s32.totalorder %s25, %s26
      %p37 = scmp.eq.s32.totalorder %s17, 0
      %p38 = por %p36, %p37
      %p39 = scmp.ne.s32.totalorder %s25, %s26
      %p40 = scmp.eq.s32.totalorder %s18, 1
      %p41 = por %p39, %p40
      %p43 = scmp.ne.s32.totalorder %s26, %s42
      %p44 = scmp.eq.s32.totalorder %s18, 0
      %p45 = por %p43, %p44
      %s47 = sadd.s32 %s46, 1
      %p50 = scmp.eq.s32.totalorder %s12, 1
      %p51 = scmp.ne.s32.totalorder %s46, %s48
      %p52 = scmp.eq.s32.totalorder %s12, 0
      %p53 = por %p51, %p52
      %p54 = scmp.ne.s32.totalorder %s46, %s48
      %p55 = scmp.eq.s32.totalorder %s17, 1
      %p56 = por %p54, %p55
      %p57 = scmp.ne.s32.totalorder %s48, %s49
      %p58 = scmp.eq.s32.totalorder %s17, 0
      %p59 = por %p57, %p58
      %p60 = scmp.ne.s32.totalorder %s48, %s49
      %p61 = scmp.eq.s32.totalorder %s18, 1
      %p62 = por %p60, %p61
      %p64 = scmp.ne.s32.totalorder %s49, %s63
      %p65 = scmp.eq.s32.totalorder %s18, 0
      %p66 = por %p64, %p65
      %s68 = sadd.s32 %s67, 1
      %p71 = scmp.eq.s32.totalorder %s12, 1
      %p72 = scmp.ne.s32.totalorder %s67, %s69
      %p73 = scmp.eq.s32.totalorder %s12, 0
      %p74 = por %p72, %p73
      %p75 = scmp.ne.s32.totalorder %s67, %s69
      %p76 = scmp.eq.s32.totalorder %s17, 1
      %p77 = por %p75, %p76
      %p78 = scmp.ne.s32.totalorder %s69, %s70
      %p79 = scmp.eq.s32.totalorder %s17, 0
      %p80 = por %p78, %p79
      %p81 = scmp.ne.s32.totalorder %s69, %s70
      %p82 = scmp.eq.s32.totalorder %s18, 1
      %p83 = por %p81, %p82
      %p85 = scmp.ne.s32.totalorder %s70, %s84
      %p86 = scmp.eq.s32.totalorder %s18, 0
      %p87 = por %p85, %p86
      %s89 = sadd.s32 %s88, 1
      %p92 = scmp.eq.s32.totalorder %s12, 1
      %p93 = scmp.ne.s32.totalorder %s88, %s90
      %p94 = scmp.eq.s32.totalorder %s12, 0
      %p95 = por %p93, %p94
      %p96 = scmp.ne.s32.totalorder %s88, %s90
      %p97 = scmp.eq.s32.totalorder %s17, 1
      %p98 = por %p96, %p97
      %p99 = scmp.ne.s32.totalorder %s90, %s91
      %p100 = scmp.eq.s32.totalorder %s17, 0
      %p101 = por %p99, %p100
      %p102 = scmp.ne.s32.totalorder %s90, %s91
      %p103 = scmp.eq.s32.totalorder %s18, 1
      %p104 = por %p102, %p103
      %p106 = scmp.ne.s32.totalorder %s91, %s105
      %p107 = scmp.eq.s32.totalorder %s18, 0
      %p108 = por %p106, %p107
      %s110 = sadd.s32 %s109, 1
      %p113 = scmp.eq.s32.totalorder %s12, 1
      %p114 = scmp.ne.s32.totalorder %s109, %s111
      %p115 = scmp.eq.s32.totalorder %s12, 0
      %p116 = por %p114, %p115
      %p117 = scmp.ne.s32.totalorder %s109, %s111
      %p118 = scmp.eq.s32.totalorder %s17, 1
      %p119 = por %p117, %p118
      %p120 = scmp.ne.s32.totalorder %s111, %s112
      %p121 = scmp.eq.s32.totalorder %s17, 0
      %p122 = por %p120, %p121
      %p123 = scmp.ne.s32.totalorder %s111, %s112
      %p124 = scmp.eq.s32.totalorder %s18, 1
      %p125 = por %p123, %p124
      %p127 = scmp.ne.s32.totalorder %s112, %s126
      %p128 = scmp.eq.s32.totalorder %s18, 0
      %p129 = por %p127, %p128
      %s130 = ssub.s32 %s12, %s19
      %p131 = scmp.eq.s32.totalorder %s130, 0
      %s133 = sadd.s32 %s132, 1
      %s134 = scalar_select %p131, %s132, %s133
      %p137 = pneg %p131
      %p138 = scmp.eq.s32.totalorder %s12, 1
      %p139 = por %p137, %p138
      %p140 = scmp.ne.s32.totalorder %s132, %s135
      %p141 = scmp.eq.s32.totalorder %s12, 0
      %p142 = por %p140, %p141
      %p143 = scmp.ne.s32.totalorder %s132, %s135
      %p144 = scmp.eq.s32.totalorder %s17, 1
      %p145 = por %p143, %p144
      %p146 = scmp.ne.s32.totalorder %s135, %s136
      %p147 = scmp.eq.s32.totalorder %s17, 0
      %p148 = por %p146, %p147
      %p149 = scmp.ne.s32.totalorder %s135, %s136
      %p150 = scmp.eq.s32.totalorder %s18, 1
      %p151 = por %p149, %p150
      %p153 = scmp.ne.s32.totalorder %s136, %s152
      %p154 = scmp.eq.s32.totalorder %s18, 0
      %p155 = por %p153, %p154
      %p156 = scmp.le.s32.totalorder 1, %s12
      %p157 = scmp.lt.s32.totalorder %s12, 3
      %p158 = pnand %p156, %p157
      %p159 = pneg %p158
      // Predicated region
      $region9: #{image_decoder_forward.4} parent=5 // pred_check
        _
      $region10: #{image_decoder_forward.4} parent=5 // pred_check_branch
        %161 = sbr.rel (%p158) target = $region12
      $region11: #{image_decoder_forward.4} parent=5 // pred_region
        %s162 = ssub.s32 %s12, 1
        // Predicated region
        $region13: #{image_decoder_forward.4} parent=11 // pred_check
          %p163 = pneg %p59
        $region14: #{image_decoder_forward.4} parent=11 // pred_check_branch
          %165 = sbr.rel (%p163) target = $region16
        $region15: #{image_decoder_forward.4} parent=11 // pred_region
          %s167 = ssub.s32 256, 256
          %168 = vsyncadd [#allocation3], %s167
          %s170 = sshll.u32 [#allocation2], 4
          %s171 = int_to_ptr.vmem [resolvable:$true] %s170
          %173 = dma.hbm_to_vmem [thread:$0]  %s1, 256, %s171, [#allocation3]
        $region16: #{image_decoder_forward.4} parent=11 // pred_fallthru
          _
        // Predicated region
        $region17: #{image_decoder_forward.4} parent=11 // pred_check
          %p174 = pneg %p80
        $region18: #{image_decoder_forward.4} parent=11 // pred_check_branch
          %176 = sbr.rel (%p174) target = $region20
        $region19: #{image_decoder_forward.4} parent=11 // pred_region
          _
        $region20: #{image_decoder_forward.4} parent=11 // pred_fallthru
          _
        // Predicated region
        $region21: #{image_decoder_forward.4} parent=11 // pred_check
          %p177 = pneg %p101
        $region22: #{image_decoder_forward.4} parent=11 // pred_check_branch
          %179 = sbr.rel (%p177) target = $region24
        $region23: #{image_decoder_forward.4} parent=11 // pred_region
          _
        $region24: #{image_decoder_forward.4} parent=11 // pred_fallthru
          _
        // Predicated region
        $region25: #{image_decoder_forward.4} parent=11 // pred_check
          %p180 = pneg %p122
        $region26: #{image_decoder_forward.4} parent=11 // pred_check_branch
          %182 = sbr.rel (%p180) target = $region28
        $region27: #{image_decoder_forward.4} parent=11 // pred_region
          _
        $region28: #{image_decoder_forward.4} parent=11 // pred_fallthru
          _
      $region12: #{image_decoder_forward.4} parent=5 // pred_fallthru
        _
      %p183 = scmp.lt.s32.totalorder %s12, 2
      // Predicated region
      $region29: #{image_decoder_forward.4} parent=5 // pred_check
        %p184 = pneg %p183
      $region30: #{image_decoder_forward.4} parent=5 // pred_check_branch
        %186 = sbr.rel (%p184) target = $region32
      $region31: #{image_decoder_forward.4} parent=5 // pred_region
        // Predicated region
        $region33: #{image_decoder_forward.4} parent=31 // pred_check
          %p187 = pneg %p32
        $region34: #{image_decoder_forward.4} parent=31 // pred_check_branch
          %189 = sbr.rel (%p187) target = $region36
        $region35: #{image_decoder_forward.4} parent=31 // pred_region
          %p190 = scmp.lt.s32.totalorder %s12, 1
          %s191 = scalar_select %p190, %s12, 1
          %s192 = smul.addr %s191, 4
          %s193 = smul.addr %s192, 4
          %s194 = scalar_lea.vmem %s0, %s193
        $region36: #{image_decoder_forward.4} parent=31 // pred_fallthru
          _
      $region32: #{image_decoder_forward.4} parent=5 // pred_fallthru
        _
      %p195 = scmp.le.s32.totalorder 1, %s12
      %p196 = scmp.lt.s32.totalorder %s12, 3
      %p197 = pnand %p195, %p196
      %p198 = pneg %p197
      // Predicated region
      $region37: #{image_decoder_forward.4} parent=5 // pred_check
        _
      $region38: #{image_decoder_forward.4} parent=5 // pred_check_branch
        %200 = sbr.rel (%p197) target = $region40
      $region39: #{image_decoder_forward.4} parent=5 // pred_region
        %s201 = ssub.s32 %s12, 1
        // Predicated region
        $region41: #{image_decoder_forward.4} parent=39 // pred_check
          %p202 = pneg %p59
        $region42: #{image_decoder_forward.4} parent=39 // pred_check_branch
          %204 = sbr.rel (%p202) target = $region44
        $region43: #{image_decoder_forward.4} parent=39 // pred_region
          %205 = dma.done [#allocation3], 256
        $region44: #{image_decoder_forward.4} parent=39 // pred_fallthru
          _
        %p206 = scmp.lt.s32.totalorder %s17, 1
        %s207 = scalar_select %p206, %s17, 1
        %s208 = smul.addr %s207, 4
        %s209 = smul.addr %s208, 4
        %s210 = scalar_lea.vmem %s0, %s209
        %p211 = pneg %p38
        %p212 = pneg %p35
        %p213 = pneg %p59
        %p214 = pneg %p56
        %p215 = pneg %p80
        %p216 = pneg %p77
        %p217 = pneg %p101
        %p218 = pneg %p98
        %p219 = pneg %p122
        %p220 = pneg %p119
        %p221 = pneg %p148
        %p222 = pneg %p145
        %p223 = scmp.lt.s32.totalorder %s17, 1
        %s224 = scalar_select %p223, %s17, 1
        %s225 = smul.addr %s224, 4
        %s226 = smul.addr %s225, 4
        %s227 = scalar_lea.vmem %s5, %s226
        %p228 = scmp.lt.s32.totalorder %s17, 1
        %s229 = scalar_select %p228, %s17, 1
        %s230 = smul.addr %s229, 4
        %s231 = smul.addr %s230, 4
        %s232 = scalar_lea.vmem %s0, %s231
        %p233 = scmp.lt.s32.totalorder %s17, 1
        %s234 = scalar_select %p233, %s17, 1
        %s235 = smul.addr %s234, 4
        %s236 = smul.addr %s235, 4
        %s237 = scalar_lea.vmem %s5, %s236
        %v239 = vld [vmem:[%s232] sm:$0xff]
        %v240 = vld [vmem:[%s232 + $0x8] sm:$0xff]
        %v243 = vunpack.c.l.b16 %v239
        %v244 = vunpack.c.l.b16 %v240
        %v245 = vpack.c.b16 %v244, %v243
        %247 = vrot.lane.b32.xlu0 %v245, 127
        %v248 = vpop.permute.xlu0 %247
        %250 = vrot.lane.b32.xlu0 %v245, 126
        %v251 = vpop.permute.xlu0 %250
        %253 = vrot.lane.b32.xlu0 %v245, 125
        %v254 = vpop.permute.xlu0 %253
        %256 = vrot.lane.b32.xlu0 %v245, 124
        %v257 = vpop.permute.xlu0 %256
        %259 = vrot.lane.b32.xlu0 %v245, 116
        %v260 = vpop.permute.xlu0 %259
        %262 = vrot.lane.b32.xlu0 %v245, 115
        %v263 = vpop.permute.xlu0 %262
        %265 = vrot.lane.b32.xlu0 %v245, 114
        %v266 = vpop.permute.xlu0 %265
        %268 = vrot.lane.b32.xlu0 %v245, 113
        %v269 = vpop.permute.xlu0 %268
        %271 = vrot.lane.b32.xlu0 %v245, 112
        %v272 = vpop.permute.xlu0 %271
        %274 = vrot.lane.b32.xlu0 %v245, 104
        %v275 = vpop.permute.xlu0 %274
        %277 = vrot.lane.b32.xlu0 %v245, 103
        %v278 = vpop.permute.xlu0 %277
        %280 = vrot.lane.b32.xlu0 %v245, 102
        %v281 = vpop.permute.xlu0 %280
        %283 = vrot.lane.b32.xlu0 %v245, 101
        %v284 = vpop.permute.xlu0 %283
        %286 = vrot.lane.b32.xlu0 %v245, 100
        %v287 = vpop.permute.xlu0 %286
        %v289 = vunpack.c.h.b16 %v239
        %v290 = vunpack.c.h.b16 %v240
        %v291 = vpack.c.b16 %v290, %v289
        %292 = vrot.lane.b32.xlu0 %v245, 92
        %v293 = vpop.permute.xlu0 %292
        %294 = vrot.lane.b32.xlu0 %v291, 92
        %v295 = vpop.permute.xlu0 %294
        %vm296 = vcmask 752640
        %v297 = vsel %vm296, %v293, %v295
        %299 = vrot.lane.b32.xlu0 %v291, 127
        %v300 = vpop.permute.xlu0 %299
        %vm301 = vcmask 1039360
        %v302 = vsel %vm301, %v248, %v300
        %303 = vrot.lane.b32.xlu0 %v291, 126
        %v304 = vpop.permute.xlu0 %303
        %vm305 = vcmask 1031168
        %v306 = vsel %vm305, %v251, %v304
        %307 = vrot.lane.b32.xlu0 %v291, 125
        %v308 = vpop.permute.xlu0 %307
        %vm309 = vcmask 1022976
        %v310 = vsel %vm309, %v254, %v308
        %311 = vrot.lane.b32.xlu0 %v245, 117
        %v312 = vpop.permute.xlu0 %311
        %313 = vrot.lane.b32.xlu0 %v291, 117
        %v314 = vpop.permute.xlu0 %313
        %vm315 = vcmask 957440
        %v316 = vsel %vm315, %v312, %v314
        %317 = vrot.lane.b32.xlu0 %v291, 116
        %v318 = vpop.permute.xlu0 %317
        %vm319 = vcmask 949248
        %v320 = vsel %vm319, %v260, %v318
        %321 = vrot.lane.b32.xlu0 %v291, 115
        %v322 = vpop.permute.xlu0 %321
        %vm323 = vcmask 941056
        %v324 = vsel %vm323, %v263, %v322
        %325 = vrot.lane.b32.xlu0 %v291, 114
        %v326 = vpop.permute.xlu0 %325
        %vm327 = vcmask 932864
        %v328 = vsel %vm327, %v266, %v326
        %329 = vrot.lane.b32.xlu0 %v291, 113
        %v330 = vpop.permute.xlu0 %329
        %vm331 = vcmask 924672
        %v332 = vsel %vm331, %v269, %v330
        %333 = vrot.lane.b32.xlu0 %v245, 91
        %v334 = vpop.permute.xlu0 %333
        %335 = vrot.lane.b32.xlu0 %v291, 91
        %v336 = vpop.permute.xlu0 %335
        %337 = vrot.lane.b32.xlu0 %v302, 91
        %v338 = vpop.permute.xlu0 %337
        %339 = vrot.lane.b32.xlu0 %v300, 91
        %v340 = vpop.permute.xlu0 %339
        %341 = vrot.lane.b32.xlu0 %v306, 91
        %v342 = vpop.permute.xlu0 %341
        %343 = vrot.lane.b32.xlu0 %v304, 91
        %v344 = vpop.permute.xlu0 %343
        %345 = vrot.lane.b32.xlu0 %v310, 91
        %v346 = vpop.permute.xlu0 %345
        %347 = vrot.lane.b32.xlu0 %v308, 91
        %v348 = vpop.permute.xlu0 %347
        %349 = vrot.lane.b32.xlu0 %v316, 91
        %v350 = vpop.permute.xlu0 %349
        %351 = vrot.lane.b32.xlu0 %v314, 91
        %v352 = vpop.permute.xlu0 %351
        %353 = vrot.lane.b32.xlu0 %v320, 91
        %v354 = vpop.permute.xlu0 %353
        %355 = vrot.lane.b32.xlu0 %v318, 91
        %v356 = vpop.permute.xlu0 %355
        %357 = vrot.lane.b32.xlu0 %v324, 91
        %v358 = vpop.permute.xlu0 %357
        %359 = vrot.lane.b32.xlu0 %v322, 91
        %v360 = vpop.permute.xlu0 %359
        %361 = vrot.lane.b32.xlu0 %v328, 91
        %v362 = vpop.permute.xlu0 %361
        %363 = vrot.lane.b32.xlu0 %v326, 91
        %v364 = vpop.permute.xlu0 %363
        %365 = vrot.lane.b32.xlu0 %v332, 91
        %v366 = vpop.permute.xlu0 %365
        %367 = vrot.lane.b32.xlu0 %v330, 91
        %v368 = vpop.permute.xlu0 %367
        %vm369 = vcmask 744448
        %v370 = vsel %vm369, %v334, %v336
        %v371 = vsel %vm369, %v338, %v340
        %v372 = vsel %vm369, %v342, %v344
        %v373 = vsel %vm369, %v346, %v348
        %v374 = vsel %vm369, %v350, %v352
        %v375 = vsel %vm369, %v354, %v356
        %v376 = vsel %vm369, %v358, %v360
        %v377 = vsel %vm369, %v362, %v364
        %v378 = vsel %vm369, %v366, %v368
        %v388 = vld [vmem:[#allocation2] sm:$0xff]
        %v389 = vld [vmem:[#allocation2 + $0x8] sm:$0xff]
        %v392 = vunpack.c.l.b16 %v388
        %v393 = vunpack.c.h.b16 %v388
        %v394 = vunpack.c.l.b16 %v389
        %v395 = vunpack.c.h.b16 %v389
        %v396 = vpack.c.b16 %v392, %v392
        %v397 = vpack.c.b16 %v393, %v393
        %v398 = vpack.c.b16 %v394, %v394
        %v399 = vpack.c.b16 %v395, %v395
        %vm403 = vcmask 130048
        %v405 = vsel %vm403, %v399, 0
        %407 = vmatprep.subr.bf16.mxu0 0
        %408 = vmatpush1.bf16.msra.mxu0 %v266
        %409 = vmatprep.subr.bf16.mxu0 0
        %410 = vmatpush1.bf16.msra.mxu0 %v263
        %411 = vmatprep.subr.bf16.mxu0 0
        %412 = vmatpush1.bf16.msra.mxu0 %v260
        %413 = vmatprep.subr.bf16.mxu0 0
        %414 = vmatpush1.bf16.msra.mxu0 %v257
        %415 = vmatprep.subr.bf16.mxu0 0
        %416 = vmatpush1.bf16.msra.mxu0 %v254
        %417 = vmatprep.subr.bf16.mxu0 0
        %418 = vmatpush1.bf16.msra.mxu0 %v251
        %419 = vmatprep.subr.bf16.mxu0 0
        %420 = vmatpush1.bf16.msra.mxu0 %v248
        %421 = vmatprep.subr.bf16.mxu0 0
        %422 = vmatpush1.bf16.msra.mxu0 %v245
        %423 = vmatprep.subr.bf16.mxu0 0
        %424 = vmatpush2.bf16.msra.mxu0 %v297
        %425 = vmatprep.subr.bf16.mxu0 0
        %426 = vmatpush2.bf16.msra.mxu0 %v287
        %427 = vmatprep.subr.bf16.mxu0 0
        %428 = vmatpush2.bf16.msra.mxu0 %v284
        %429 = vmatprep.subr.bf16.mxu0 0
        %430 = vmatpush2.bf16.msra.mxu0 %v281
        %431 = vmatprep.subr.bf16.mxu0 0
        %432 = vmatpush2.bf16.msra.mxu0 %v278
        %433 = vmatprep.subr.bf16.mxu0 0
        %434 = vmatpush2.bf16.msra.mxu0 %v275
        %435 = vmatprep.subr.bf16.mxu0 0
        %436 = vmatpush2.bf16.msra.mxu0 %v272
        %437 = vmatprep.subr.bf16.mxu0 0
        %438 = vmatpush2.bf16.msra.mxu0 %v269
        %439 = vmatprep.mubr.bf16.mxu0 %v397
        %440 = vmatmul.mubr.bf16.gmra.mxu0 %v396
        %v441 = vpop.f32.mrf.mxu0
        %v442 = vadd.f32 0.0, %v441
        %v443 = vpop.f32.mrf.mxu0
        %v444 = vpop.f32.mrf.mxu0
        %v445 = vpop.f32.mrf.mxu0
        %446 = vdwg.mxu0
        %447 = vmatprep.subr.bf16.mxu0 0
        %448 = vmatpush1.bf16.msra.mxu0 %v377
        %449 = vmatprep.subr.bf16.mxu0 0
        %450 = vmatpush1.bf16.msra.mxu0 %v376
        %451 = vmatprep.subr.bf16.mxu0 0
        %452 = vmatpush1.bf16.msra.mxu0 %v375
        %453 = vmatprep.subr.bf16.mxu0 0
        %454 = vmatpush1.bf16.msra.mxu0 %v374
        %455 = vmatprep.subr.bf16.mxu0 0
        %456 = vmatpush1.bf16.msra.mxu0 %v373
        %457 = vmatprep.subr.bf16.mxu0 0
        %458 = vmatpush1.bf16.msra.mxu0 %v372
        %459 = vmatprep.subr.bf16.mxu0 0
        %460 = vmatpush1.bf16.msra.mxu0 %v371
        %461 = vmatprep.subr.bf16.mxu0 0
        %462 = vmatpush1.bf16.msra.mxu0 %v370
        %463 = vmatprep.subr.bf16.mxu0 0
        %464 = vmatpush2.bf16.msra.mxu0 0
        %465 = vmatprep.subr.bf16.mxu0 0
        %466 = vmatpush2.bf16.msra.mxu0 0
        %467 = vmatprep.subr.bf16.mxu0 0
        %468 = vmatpush2.bf16.msra.mxu0 0
        %469 = vmatprep.subr.bf16.mxu0 0
        %470 = vmatpush2.bf16.msra.mxu0 0
        %471 = vmatprep.subr.bf16.mxu0 0
        %472 = vmatpush2.bf16.msra.mxu0 0
        %473 = vmatprep.subr.bf16.mxu0 0
        %474 = vmatpush2.bf16.msra.mxu0 0
        %475 = vmatprep.subr.bf16.mxu0 0
        %476 = vmatpush2.bf16.msra.mxu0 0
        %477 = vmatprep.subr.bf16.mxu0 0
        %478 = vmatpush2.bf16.msra.mxu0 %v378
        %479 = vmatprep.mubr.bf16.mxu0 %v405
        %480 = vmatmul.mubr.bf16.gmra.mxu0 %v398
        %v481 = vpop.f32.mrf.mxu0
        %v482 = vadd.f32 %v442, %v481
        %v483 = vpop.f32.mrf.mxu0
        %v484 = vpop.f32.mrf.mxu0
        %v485 = vpop.f32.mrf.mxu0
        %486 = vdwg.mxu0
        %v487 = vld [vmem:[%s2] sm:$0xff]
        %489 = vset.pattern.permute.xlu0 0
        %490 = vperm.xlu0 %489, %v487
        %v491 = vpop.permute.xlu0 %490
        %v493 = vmul.f32 %v482, %v491
        %v494 = vld [vmem:[%s3] sm:$0xff]
        %496 = vset.pattern.permute.xlu0 0
        %497 = vperm.xlu0 %496, %v494
        %v498 = vpop.permute.xlu0 %497
        %v500 = vadd.f32 %v493, %v498
        %vm501 = vcmp.ge.f32.partialorder %v500, 0.0
        %v502 = vmul.f32 %v500, 0.01
        %v503 = vsel %vm501, %v500, %v502
        %v504 = vld [vmem:[%s4] sm:$0xf]
        %v505 = vld [vmem:[%s4 + $0x4] sm:$0xf]
        %v506 = vld [vmem:[%s4 + $0x8] sm:$0xf]
        %v507 = vld [vmem:[%s4 + $0xc] sm:$0xf]
        %v508 = vpack.c.bf16 %v503, %v503
        %v513 = vunpack.c.l.b16 %v504
        %v514 = vunpack.c.l.b16 %v505
        %v515 = vunpack.c.l.b16 %v506
        %v516 = vunpack.c.l.b16 %v507
        %v517 = vpack.c.b16 %v514, %v513
        %v518 = vpack.c.b16 %v516, %v515
        %vm519 = vcmask 64512
        %v521 = vsel %vm519, %v517, 0
        %v524 = vsel %vm519, %v518, 0
        %vm526 = vcmask 1043456
        %v528 = vsel %vm526, %v508, 0
        %530 = vmatprep.subr.bf16.mxu0 0
        %531 = vmatpush1.bf16.msra.mxu0 0
        %532 = vmatprep.subr.bf16.mxu0 0
        %533 = vmatpush1.bf16.msra.mxu0 0
        %534 = vmatprep.subr.bf16.mxu0 0
        %535 = vmatpush1.bf16.msra.mxu0 0
        %536 = vmatprep.subr.bf16.mxu0 0
        %537 = vmatpush1.bf16.msra.mxu0 0
        %538 = vmatprep.subr.bf16.mxu0 0
        %539 = vmatpush1.bf16.msra.mxu0 0
        %540 = vmatprep.subr.bf16.mxu0 0
        %541 = vmatpush1.bf16.msra.mxu0 0
        %542 = vmatprep.subr.bf16.mxu0 0
        %543 = vmatpush1.bf16.msra.mxu0 0
        %544 = vmatprep.subr.bf16.mxu0 0
        %545 = vmatpush1.bf16.msra.mxu0 %v528
        %546 = vmatprep.subr.bf16.mxu0 0
        %547 = vmatpush2.bf16.msra.mxu0 0
        %548 = vmatprep.subr.bf16.mxu0 0
        %549 = vmatpush2.bf16.msra.mxu0 0
        %550 = vmatprep.subr.bf16.mxu0 0
        %551 = vmatpush2.bf16.msra.mxu0 0
        %552 = vmatprep.subr.bf16.mxu0 0
        %553 = vmatpush2.bf16.msra.mxu0 0
        %554 = vmatprep.subr.bf16.mxu0 0
        %555 = vmatpush2.bf16.msra.mxu0 0
        %556 = vmatprep.subr.bf16.mxu0 0
        %557 = vmatpush2.bf16.msra.mxu0 0
        %558 = vmatprep.subr.bf16.mxu0 0
        %559 = vmatpush2.bf16.msra.mxu0 0
        %560 = vmatprep.subr.bf16.mxu0 0
        %561 = vmatpush2.bf16.msra.mxu0 0
        %562 = vmatprep.mubr.bf16.mxu0 0
        %563 = vmatmul.mubr.bf16.gmra.mxu0 %v521
        %v564 = vpop.f32.mrf.mxu0
        %v565 = vadd.f32 0.0, %v564
        %v566 = vpop.f32.mrf.mxu0
        %v567 = vpop.f32.mrf.mxu0
        %v568 = vadd.f32 0.0, %v567
        %v569 = vpop.f32.mrf.mxu0
        %570 = vmatprep.mubr.bf16.mxu0 0
        %571 = vmatmul.mubr.bf16.gmra.mxu0 %v524
        %v572 = vpop.f32.mrf.mxu0
        %v573 = vadd.f32 0.0, %v572
        %v574 = vpop.f32.mrf.mxu0
        %v575 = vpop.f32.mrf.mxu0
        %v576 = vadd.f32 0.0, %v575
        %v577 = vpop.f32.mrf.mxu0
        %578 = vdwg.mxu0
        %v579 = vpack.c.bf16 %v568, %v565
        %v580 = vpack.c.bf16 %v576, %v573
        %v583 = vunpack.c.l.b16 %v579
        %v584 = vunpack.c.h.b16 %v579
        %v585 = vunpack.c.l.b16 %v580
        %v586 = vunpack.c.h.b16 %v580
        %v587 = vpack.c.b16 %v583, %v583
        %v588 = vpack.c.b16 %v584, %v584
        %v589 = vpack.c.b16 %v585, %v585
        %v590 = vpack.c.b16 %v586, %v586
        %vm595 = vcmask 781312
        %596 = vst.msk [vmem:[%s237] sm:$0xf] %vm595, %v587
        %597 = vst.msk [vmem:[%s237 + $0x4] sm:$0xf] %vm595, %v588
        %598 = vst.msk [vmem:[%s237 + $0x8] sm:$0xf] %vm595, %v589
        %599 = vst.msk [vmem:[%s237 + $0xc] sm:$0xf] %vm595, %v590
        %p600 = scmp.lt.s32.totalorder %s17, 1
        %s601 = scalar_select %p600, %s17, 1
        %s602 = smul.addr %s601, 4
        %s603 = smul.addr %s602, 4
        %s604 = scalar_lea.vmem %s5, %s603
        // Predicated region
        $region45: #{image_decoder_forward.4} parent=39 // pred_check
          %p605 = pneg %p145
        $region46: #{image_decoder_forward.4} parent=39 // pred_check_branch
          %607 = sbr.rel (%p605) target = $region48
        $region47: #{image_decoder_forward.4} parent=39 // pred_region
          _
        $region48: #{image_decoder_forward.4} parent=39 // pred_fallthru
          _
      $region40: #{image_decoder_forward.4} parent=5 // pred_fallthru
        _
      %p608 = scmp.le.s32.totalorder 2, %s12
      // Predicated region
      $region49: #{image_decoder_forward.4} parent=5 // pred_check
        %p609 = pneg %p608
      $region50: #{image_decoder_forward.4} parent=5 // pred_check_branch
        %611 = sbr.rel (%p609) target = $region52
      $region51: #{image_decoder_forward.4} parent=5 // pred_region
        %s612 = ssub.s32 %s12, 2
        // Predicated region
        $region53: #{image_decoder_forward.4} parent=51 // pred_check
          %p613 = pneg %p151
        $region54: #{image_decoder_forward.4} parent=51 // pred_check_branch
          %615 = sbr.rel (%p613) target = $region56
        $region55: #{image_decoder_forward.4} parent=51 // pred_region
          %p616 = scmp.lt.s32.totalorder %s18, 1
          %s617 = scalar_select %p616, %s18, 1
          %s618 = smul.addr %s617, 4
          %s619 = smul.addr %s618, 4
          %s620 = scalar_lea.vmem %s5, %s619
        $region56: #{image_decoder_forward.4} parent=51 // pred_fallthru
          _
      $region52: #{image_decoder_forward.4} parent=5 // pred_fallthru
        _
    $region6: #{image_decoder_forward.4} parent=1 // loop_footer
      %s16 = sadd.s32 1, %s12
    $region7: #{image_decoder_forward.4} parent=1 // loop_footer_branch
      %11 = sbr.rel target = $region3
    $region8: #{image_decoder_forward.4} parent=1 // loop_exit
      _
    %621 = vsyncpa [#allocation3], 1
    %s622 = scalar_lea.sflag [#allocation3], 1
    %623 = vsyncpa %s622, 1

// kernel: image_decoder_forward.5
$region0: #{image_decoder_forward.5}
  #allocation0 [shape = 'u32[]', space=smem, size = 0x4, offset = 0x4, fixed_abs, tag = 'smem constant byte address 0x4 - core index']
  #allocation1 [shape = 'u32[144,128]{1,0:T(1,128)}', space=vmem, size = 0x12000, scoped, tag = 'internal scratch']
  %s0 = inlined_call_operand.vmem [shape: bf16[2,16,404], index: 0, kind: input, shape index: {}]
  %s1 = inlined_call_operand.vmem [shape: bf16[3,400], index: 1, kind: input, shape index: {}]
  %s2 = inlined_call_operand.vmem [shape: f32[3,1], index: 2, kind: input, shape index: {}]
  %s3 = inlined_call_operand.vmem [shape: f32[3,1], index: 3, kind: input, shape index: {}]
  %s4 = inlined_call_operand.vmem [shape: bf16[12,3], index: 4, kind: input, shape index: {}]
  %s5 = inlined_call_operand.vmem [shape: f32[2,12,320], index: 5, kind: output, shape index: {}]
  %s6 = sld [smem:[#allocation0]]
  $region53: #{image_decoder_forward.5} parent=0
    _
  %s8 = ssub.s32 1, %s6
  %s9 = scalar_select 0, %s8, %s6
  loop: start=0, step=1, limit=4
  $region2: #{image_decoder_forward.5} parent=0 // loop_pre_header
    _
  $region3: #{image_decoder_forward.5} parent=0 // loop_header
    %s11 = sphi 0, %s15
    %p12 = scmp.ge.s32.totalorder %s11, 4
    %s21 = sphi 0, %s23
    %s24 = sphi 0, %s21
    %s25 = sphi 0, %s24
    %s41 = sphi 0, %s25
    %s45 = sphi 0, %s45
    %s47 = sphi 0, %s45
    %s48 = sphi 0, %s47
    %s62 = sphi 0, %s48
    %s66 = sphi 0, %s66
    %s68 = sphi 0, %s66
    %s69 = sphi 0, %s68
    %s83 = sphi 0, %s69
    %s87 = sphi 0, %s87
    %s89 = sphi 0, %s87
    %s90 = sphi 0, %s89
    %s104 = sphi 0, %s90
    %s108 = sphi 0, %s108
    %s110 = sphi 0, %s108
    %s111 = sphi 0, %s110
    %s125 = sphi 0, %s111
    %s131 = sphi 0, %s133
    %s134 = sphi 0, %s131
    %s135 = sphi 0, %s134
    %s151 = sphi 0, %s135
  $region4: #{image_decoder_forward.5} parent=0 // loop_header_branch
    %14 = sbr.rel (%p12) target = $region8
  $region5: #{image_decoder_forward.5} parent=0 // loop_body
    %s16 = ssub.s32 %s11, 1
    %s17 = ssub.s32 %s11, 2
    %s18 = sadd.s32 %s11, 1
    %s19 = ssub.s32 %s11, %s18
    %p20 = scmp.eq.s32.totalorder %s19, 0
    %s22 = sadd.s32 %s21, 1
    %s23 = scalar_select %p20, %s21, %s22
    %p26 = pneg %p20
    %p27 = scmp.eq.s32.totalorder %s11, 1
    %p28 = por %p26, %p27
    %p29 = scmp.ne.s32.totalorder %s21, %s24
    %p30 = scmp.eq.s32.totalorder %s11, 0
    %p31 = por %p29, %p30
    %p32 = scmp.ne.s32.totalorder %s21, %s24
    %p33 = scmp.eq.s32.totalorder %s16, 1
    %p34 = por %p32, %p33
    %p35 = scmp.ne.s32.totalorder %s24, %s25
    %p36 = scmp.eq.s32.totalorder %s16, 0
    %p37 = por %p35, %p36
    %p38 = scmp.ne.s32.totalorder %s24, %s25
    %p39 = scmp.eq.s32.totalorder %s17, 1
    %p40 = por %p38, %p39
    %p42 = scmp.ne.s32.totalorder %s25, %s41
    %p43 = scmp.eq.s32.totalorder %s17, 0
    %p44 = por %p42, %p43
    %s46 = sadd.s32 %s45, 1
    %p49 = scmp.eq.s32.totalorder %s11, 1
    %p50 = scmp.ne.s32.totalorder %s45, %s47
    %p51 = scmp.eq.s32.totalorder %s11, 0
    %p52 = por %p50, %p51
    %p53 = scmp.ne.s32.totalorder %s45, %s47
    %p54 = scmp.eq.s32.totalorder %s16, 1
    %p55 = por %p53, %p54
    %p56 = scmp.ne.s32.totalorder %s47, %s48
    %p57 = scmp.eq.s32.totalorder %s16, 0
    %p58 = por %p56, %p57
    %p59 = scmp.ne.s32.totalorder %s47, %s48
    %p60 = scmp.eq.s32.totalorder %s17, 1
    %p61 = por %p59, %p60
    %p63 = scmp.ne.s32.totalorder %s48, %s62
    %p64 = scmp.eq.s32.totalorder %s17, 0
    %p65 = por %p63, %p64
    %s67 = sadd.s32 %s66, 1
    %p70 = scmp.eq.s32.totalorder %s11, 1
    %p71 = scmp.ne.s32.totalorder %s66, %s68
    %p72 = scmp.eq.s32.totalorder %s11, 0
    %p73 = por %p71, %p72
    %p74 = scmp.ne.s32.totalorder %s66, %s68
    %p75 = scmp.eq.s32.totalorder %s16, 1
    %p76 = por %p74, %p75
    %p77 = scmp.ne.s32.totalorder %s68, %s69
    %p78 = scmp.eq.s32.totalorder %s16, 0
    %p79 = por %p77, %p78
    %p80 = scmp.ne.s32.totalorder %s68, %s69
    %p81 = scmp.eq.s32.totalorder %s17, 1
    %p82 = por %p80, %p81
    %p84 = scmp.ne.s32.totalorder %s69, %s83
    %p85 = scmp.eq.s32.totalorder %s17, 0
    %p86 = por %p84, %p85
    %s88 = sadd.s32 %s87, 1
    %p91 = scmp.eq.s32.totalorder %s11, 1
    %p92 = scmp.ne.s32.totalorder %s87, %s89
    %p93 = scmp.eq.s32.totalorder %s11, 0
    %p94 = por %p92, %p93
    %p95 = scmp.ne.s32.totalorder %s87, %s89
    %p96 = scmp.eq.s32.totalorder %s16, 1
    %p97 = por %p95, %p96
    %p98 = scmp.ne.s32.totalorder %s89, %s90
    %p99 = scmp.eq.s32.totalorder %s16, 0
    %p100 = por %p98, %p99
    %p101 = scmp.ne.s32.totalorder %s89, %s90
    %p102 = scmp.eq.s32.totalorder %s17, 1
    %p103 = por %p101, %p102
    %p105 = scmp.ne.s32.totalorder %s90, %s104
    %p106 = scmp.eq.s32.totalorder %s17, 0
    %p107 = por %p105, %p106
    %s109 = sadd.s32 %s108, 1
    %p112 = scmp.eq.s32.totalorder %s11, 1
    %p113 = scmp.ne.s32.totalorder %s108, %s110
    %p114 = scmp.eq.s32.totalorder %s11, 0
    %p115 = por %p113, %p114
    %p116 = scmp.ne.s32.totalorder %s108, %s110
    %p117 = scmp.eq.s32.totalorder %s16, 1
    %p118 = por %p116, %p117
    %p119 = scmp.ne.s32.totalorder %s110, %s111
    %p120 = scmp.eq.s32.totalorder %s16, 0
    %p121 = por %p119, %p120
    %p122 = scmp.ne.s32.totalorder %s110, %s111
    %p123 = scmp.eq.s32.totalorder %s17, 1
    %p124 = por %p122, %p123
    %p126 = scmp.ne.s32.totalorder %s111, %s125
    %p127 = scmp.eq.s32.totalorder %s17, 0
    %p128 = por %p126, %p127
    %s129 = ssub.s32 %s11, %s18
    %p130 = scmp.eq.s32.totalorder %s129, 0
    %s132 = sadd.s32 %s131, 1
    %s133 = scalar_select %p130, %s131, %s132
    %p136 = pneg %p130
    %p137 = scmp.eq.s32.totalorder %s11, 1
    %p138 = por %p136, %p137
    %p139 = scmp.ne.s32.totalorder %s131, %s134
    %p140 = scmp.eq.s32.totalorder %s11, 0
    %p141 = por %p139, %p140
    %p142 = scmp.ne.s32.totalorder %s131, %s134
    %p143 = scmp.eq.s32.totalorder %s16, 1
    %p144 = por %p142, %p143
    %p145 = scmp.ne.s32.totalorder %s134, %s135
    %p146 = scmp.eq.s32.totalorder %s16, 0
    %p147 = por %p145, %p146
    %p148 = scmp.ne.s32.totalorder %s134, %s135
    %p149 = scmp.eq.s32.totalorder %s17, 1
    %p150 = por %p148, %p149
    %p152 = scmp.ne.s32.totalorder %s135, %s151
    %p153 = scmp.eq.s32.totalorder %s17, 0
    %p154 = por %p152, %p153
    %p155 = scmp.le.s32.totalorder 1, %s11
    %p156 = scmp.lt.s32.totalorder %s11, 3
    %p157 = pnand %p155, %p156
    %p158 = pneg %p157
    // Predicated region
    $region9: #{image_decoder_forward.5} parent=5 // pred_check
      _
    $region10: #{image_decoder_forward.5} parent=5 // pred_check_branch
      %160 = sbr.rel (%p157) target = $region12
    $region11: #{image_decoder_forward.5} parent=5 // pred_region
      %s161 = ssub.s32 %s11, 1
      // Predicated region
      $region13: #{image_decoder_forward.5} parent=11 // pred_check
        %p162 = pneg %p58
      $region14: #{image_decoder_forward.5} parent=11 // pred_check_branch
        %164 = sbr.rel (%p162) target = $region16
      $region15: #{image_decoder_forward.5} parent=11 // pred_region
        _
      $region16: #{image_decoder_forward.5} parent=11 // pred_fallthru
        _
      // Predicated region
      $region17: #{image_decoder_forward.5} parent=11 // pred_check
        %p165 = pneg %p79
      $region18: #{image_decoder_forward.5} parent=11 // pred_check_branch
        %167 = sbr.rel (%p165) target = $region20
      $region19: #{image_decoder_forward.5} parent=11 // pred_region
        _
      $region20: #{image_decoder_forward.5} parent=11 // pred_fallthru
        _
      // Predicated region
      $region21: #{image_decoder_forward.5} parent=11 // pred_check
        %p168 = pneg %p100
      $region22: #{image_decoder_forward.5} parent=11 // pred_check_branch
        %170 = sbr.rel (%p168) target = $region24
      $region23: #{image_decoder_forward.5} parent=11 // pred_region
        _
      $region24: #{image_decoder_forward.5} parent=11 // pred_fallthru
        _
      // Predicated region
      $region25: #{image_decoder_forward.5} parent=11 // pred_check
        %p171 = pneg %p121
      $region26: #{image_decoder_forward.5} parent=11 // pred_check_branch
        %173 = sbr.rel (%p171) target = $region28
      $region27: #{image_decoder_forward.5} parent=11 // pred_region
        _
      $region28: #{image_decoder_forward.5} parent=11 // pred_fallthru
        _
    $region12: #{image_decoder_forward.5} parent=5 // pred_fallthru
      _
    %p174 = scmp.lt.s32.totalorder %s11, 2
    // Predicated region
    $region29: #{image_decoder_forward.5} parent=5 // pred_check
      %p175 = pneg %p174
    $region30: #{image_decoder_forward.5} parent=5 // pred_check_branch
      %177 = sbr.rel (%p175) target = $region32
    $region31: #{image_decoder_forward.5} parent=5 // pred_region
      // Predicated region
      $region33: #{image_decoder_forward.5} parent=31 // pred_check
        %p178 = pneg %p31
      $region34: #{image_decoder_forward.5} parent=31 // pred_check_branch
        %180 = sbr.rel (%p178) target = $region36
      $region35: #{image_decoder_forward.5} parent=31 // pred_region
        %p181 = scmp.lt.s32.totalorder %s11, 1
        %s182 = scalar_select %p181, %s11, 1
        %s183 = smul.addr %s182, 8
        %s184 = smul.addr %s183, 4
        %s185 = scalar_lea.vmem %s0, %s184
      $region36: #{image_decoder_forward.5} parent=31 // pred_fallthru
        _
    $region32: #{image_decoder_forward.5} parent=5 // pred_fallthru
      _
    %p186 = scmp.le.s32.totalorder 1, %s11
    %p187 = scmp.lt.s32.totalorder %s11, 3
    %p188 = pnand %p186, %p187
    %p189 = pneg %p188
    // Predicated region
    $region37: #{image_decoder_forward.5} parent=5 // pred_check
      _
    $region38: #{image_decoder_forward.5} parent=5 // pred_check_branch
      %191 = sbr.rel (%p188) target = $region40
    $region39: #{image_decoder_forward.5} parent=5 // pred_region
      %s192 = ssub.s32 %s11, 1
      %p193 = scmp.lt.s32.totalorder %s16, 1
      %s194 = scalar_select %p193, %s16, 1
      %s195 = smul.addr %s194, 8
      %s196 = smul.addr %s195, 4
      %s197 = scalar_lea.vmem %s0, %s196
      %p198 = pneg %p37
      %p199 = pneg %p34
      %p200 = pneg %p58
      %p201 = pneg %p55
      %p202 = pneg %p79
      %p203 = pneg %p76
      %p204 = pneg %p100
      %p205 = pneg %p97
      %p206 = pneg %p121
      %p207 = pneg %p118
      %p208 = pneg %p147
      %p209 = pneg %p144
      %p210 = scmp.lt.s32.totalorder %s16, 1
      %s211 = scalar_select %p210, %s16, 1
      %s212 = smul.addr %s211, 6
      %s213 = smul.addr %s212, 8
      %s214 = scalar_lea.vmem %s5, %s213
      %p215 = scmp.lt.s32.totalorder %s16, 1
      %s216 = scalar_select %p215, %s16, 1
      %s217 = smul.addr %s216, 8
      %s218 = smul.addr %s217, 4
      %s219 = scalar_lea.vmem %s0, %s218
      %p220 = scmp.lt.s32.totalorder %s16, 1
      %s221 = scalar_select %p220, %s16, 1
      %s222 = smul.addr %s221, 6
      %s223 = smul.addr %s222, 8
      %s224 = scalar_lea.vmem %s5, %s223
      %v226 = vld [vmem:[%s219] sm:$0xff]
      %v227 = vld [vmem:[%s219 + $0x8] sm:$0xff]
      %v228 = vld [vmem:[%s219 + $0x10] sm:$0xff]
      %v229 = vld [vmem:[%s219 + $0x18] sm:$0xff]
      %v234 = vunpack.c.l.b16 %v226
      %v235 = vunpack.c.h.b16 %v226
      %v236 = vunpack.c.l.b16 %v227
      %v237 = vunpack.c.l.b16 %v228
      %v238 = vunpack.c.h.b16 %v228
      %v239 = vunpack.c.l.b16 %v229
      %v240 = vpack.c.b16 %v237, %v234
      %v241 = vpack.c.b16 %v238, %v235
      %v242 = vpack.c.b16 %v239, %v236
      %246 = vrot.lane.b32.xlu0 %v240, 127
      %v247 = vpop.permute.xlu0 %246
      %248 = vrot.lane.b32.xlu0 %v241, 127
      %v249 = vpop.permute.xlu0 %248
      %250 = vrot.lane.b32.xlu0 %v242, 127
      %v251 = vpop.permute.xlu0 %250
      %vm252 = vcmask 1039360
      %v253 = vsel %vm252, %v247, %v249
      %v254 = vsel %vm252, %v249, %v251
      %258 = vrot.lane.b32.xlu0 %v240, 126
      %v259 = vpop.permute.xlu0 %258
      %260 = vrot.lane.b32.xlu0 %v241, 126
      %v261 = vpop.permute.xlu0 %260
      %262 = vrot.lane.b32.xlu0 %v242, 126
      %v263 = vpop.permute.xlu0 %262
      %vm264 = vcmask 1031168
      %v265 = vsel %vm264, %v259, %v261
      %v266 = vsel %vm264, %v261, %v263
      %270 = vrot.lane.b32.xlu0 %v240, 125
      %v271 = vpop.permute.xlu0 %270
      %272 = vrot.lane.b32.xlu0 %v241, 125
      %v273 = vpop.permute.xlu0 %272
      %274 = vrot.lane.b32.xlu0 %v242, 125
      %v275 = vpop.permute.xlu0 %274
      %vm276 = vcmask 1022976
      %v277 = vsel %vm276, %v271, %v273
      %v278 = vsel %vm276, %v273, %v275
      %282 = vrot.lane.b32.xlu0 %v240, 124
      %v283 = vpop.permute.xlu0 %282
      %284 = vrot.lane.b32.xlu0 %v241, 124
      %v285 = vpop.permute.xlu0 %284
      %286 = vrot.lane.b32.xlu0 %v242, 124
      %v287 = vpop.permute.xlu0 %286
      %vm288 = vcmask 1014784
      %v289 = vsel %vm288, %v283, %v285
      %v290 = vsel %vm288, %v285, %v287
      %294 = vrot.lane.b32.xlu0 %v240, 108
      %v295 = vpop.permute.xlu0 %294
      %296 = vrot.lane.b32.xlu0 %v241, 108
      %v297 = vpop.permute.xlu0 %296
      %298 = vrot.lane.b32.xlu0 %v242, 108
      %v299 = vpop.permute.xlu0 %298
      %vm300 = vcmask 883712
      %v301 = vsel %vm300, %v295, %v297
      %v302 = vsel %vm300, %v297, %v299
      %306 = vrot.lane.b32.xlu0 %v240, 107
      %v307 = vpop.permute.xlu0 %306
      %308 = vrot.lane.b32.xlu0 %v241, 107
      %v309 = vpop.permute.xlu0 %308
      %310 = vrot.lane.b32.xlu0 %v242, 107
      %v311 = vpop.permute.xlu0 %310
      %vm312 = vcmask 875520
      %v313 = vsel %vm312, %v307, %v309
      %v314 = vsel %vm312, %v309, %v311
      %318 = vrot.lane.b32.xlu0 %v240, 106
      %v319 = vpop.permute.xlu0 %318
      %320 = vrot.lane.b32.xlu0 %v241, 106
      %v321 = vpop.permute.xlu0 %320
      %322 = vrot.lane.b32.xlu0 %v242, 106
      %v323 = vpop.permute.xlu0 %322
      %vm324 = vcmask 867328
      %v325 = vsel %vm324, %v319, %v321
      %v326 = vsel %vm324, %v321, %v323
      %330 = vrot.lane.b32.xlu0 %v240, 105
      %v331 = vpop.permute.xlu0 %330
      %332 = vrot.lane.b32.xlu0 %v241, 105
      %v333 = vpop.permute.xlu0 %332
      %334 = vrot.lane.b32.xlu0 %v242, 105
      %v335 = vpop.permute.xlu0 %334
      %vm336 = vcmask 859136
      %v337 = vsel %vm336, %v331, %v333
      %v338 = vsel %vm336, %v333, %v335
      %342 = vrot.lane.b32.xlu0 %v240, 104
      %v343 = vpop.permute.xlu0 %342
      %344 = vrot.lane.b32.xlu0 %v241, 104
      %v345 = vpop.permute.xlu0 %344
      %346 = vrot.lane.b32.xlu0 %v242, 104
      %v347 = vpop.permute.xlu0 %346
      %vm348 = vcmask 850944
      %v349 = vsel %vm348, %v343, %v345
      %v350 = vsel %vm348, %v345, %v347
      %354 = vrot.lane.b32.xlu0 %v240, 88
      %v355 = vpop.permute.xlu0 %354
      %356 = vrot.lane.b32.xlu0 %v241, 88
      %v357 = vpop.permute.xlu0 %356
      %358 = vrot.lane.b32.xlu0 %v242, 88
      %v359 = vpop.permute.xlu0 %358
      %vm360 = vcmask 719872
      %v361 = vsel %vm360, %v355, %v357
      %v362 = vsel %vm360, %v357, %v359
      %366 = vrot.lane.b32.xlu0 %v240, 87
      %v367 = vpop.permute.xlu0 %366
      %368 = vrot.lane.b32.xlu0 %v241, 87
      %v369 = vpop.permute.xlu0 %368
      %370 = vrot.lane.b32.xlu0 %v242, 87
      %v371 = vpop.permute.xlu0 %370
      %vm372 = vcmask 711680
      %v373 = vsel %vm372, %v367, %v369
      %v374 = vsel %vm372, %v369, %v371
      %378 = vrot.lane.b32.xlu0 %v240, 86
      %v379 = vpop.permute.xlu0 %378
      %380 = vrot.lane.b32.xlu0 %v241, 86
      %v381 = vpop.permute.xlu0 %380
      %382 = vrot.lane.b32.xlu0 %v242, 86
      %v383 = vpop.permute.xlu0 %382
      %vm384 = vcmask 703488
      %v385 = vsel %vm384, %v379, %v381
      %v386 = vsel %vm384, %v381, %v383
      %390 = vrot.lane.b32.xlu0 %v240, 85
      %v391 = vpop.permute.xlu0 %390
      %392 = vrot.lane.b32.xlu0 %v241, 85
      %v393 = vpop.permute.xlu0 %392
      %394 = vrot.lane.b32.xlu0 %v242, 85
      %v395 = vpop.permute.xlu0 %394
      %vm396 = vcmask 695296
      %v397 = vsel %vm396, %v391, %v393
      %v398 = vsel %vm396, %v393, %v395
      %402 = vrot.lane.b32.xlu0 %v240, 84
      %v403 = vpop.permute.xlu0 %402
      %404 = vrot.lane.b32.xlu0 %v241, 84
      %v405 = vpop.permute.xlu0 %404
      %406 = vrot.lane.b32.xlu0 %v242, 84
      %v407 = vpop.permute.xlu0 %406
      %vm408 = vcmask 687104
      %v409 = vsel %vm408, %v403, %v405
      %v410 = vsel %vm408, %v405, %v407
      %414 = vrot.lane.b32.xlu0 %v240, 68
      %v415 = vpop.permute.xlu0 %414
      %416 = vrot.lane.b32.xlu0 %v241, 68
      %v417 = vpop.permute.xlu0 %416
      %418 = vrot.lane.b32.xlu0 %v242, 68
      %v419 = vpop.permute.xlu0 %418
      %vm420 = vcmask 556032
      %v421 = vsel %vm420, %v415, %v417
      %v422 = vsel %vm420, %v417, %v419
      %v426 = vunpack.c.h.b16 %v227
      %v427 = vunpack.c.h.b16 %v229
      %v428 = vpack.c.b16 %v427, %v426
      %429 = vrot.lane.b32.xlu0 %v240, 109
      %v430 = vpop.permute.xlu0 %429
      %431 = vrot.lane.b32.xlu0 %v241, 109
      %v432 = vpop.permute.xlu0 %431
      %433 = vrot.lane.b32.xlu0 %v242, 109
      %v434 = vpop.permute.xlu0 %433
      %435 = vrot.lane.b32.xlu0 %v428, 109
      %v436 = vpop.permute.xlu0 %435
      %vm437 = vcmask 891904
      %v438 = vsel %vm437, %v430, %v432
      %v439 = vsel %vm437, %v432, %v434
      %v440 = vsel %vm437, %v434, %v436
      %441 = vrot.lane.b32.xlu0 %v428, 108
      %v442 = vpop.permute.xlu0 %441
      %v443 = vsel %vm300, %v299, %v442
      %444 = vrot.lane.b32.xlu0 %v428, 107
      %v445 = vpop.permute.xlu0 %444
      %v446 = vsel %vm312, %v311, %v445
      %447 = vrot.lane.b32.xlu0 %v428, 106
      %v448 = vpop.permute.xlu0 %447
      %v449 = vsel %vm324, %v323, %v448
      %450 = vrot.lane.b32.xlu0 %v428, 105
      %v451 = vpop.permute.xlu0 %450
      %v452 = vsel %vm336, %v335, %v451
      %453 = vrot.lane.b32.xlu0 %v240, 67
      %v454 = vpop.permute.xlu0 %453
      %455 = vrot.lane.b32.xlu0 %v241, 67
      %v456 = vpop.permute.xlu0 %455
      %457 = vrot.lane.b32.xlu0 %v242, 67
      %v458 = vpop.permute.xlu0 %457
      %459 = vrot.lane.b32.xlu0 %v253, 67
      %v460 = vpop.permute.xlu0 %459
      %461 = vrot.lane.b32.xlu0 %v254, 67
      %v462 = vpop.permute.xlu0 %461
      %463 = vrot.lane.b32.xlu0 %v251, 67
      %v464 = vpop.permute.xlu0 %463
      %465 = vrot.lane.b32.xlu0 %v265, 67
      %v466 = vpop.permute.xlu0 %465
      %467 = vrot.lane.b32.xlu0 %v266, 67
      %v468 = vpop.permute.xlu0 %467
      %469 = vrot.lane.b32.xlu0 %v263, 67
      %v470 = vpop.permute.xlu0 %469
      %471 = vrot.lane.b32.xlu0 %v277, 67
      %v472 = vpop.permute.xlu0 %471
      %473 = vrot.lane.b32.xlu0 %v278, 67
      %v474 = vpop.permute.xlu0 %473
      %475 = vrot.lane.b32.xlu0 %v275, 67
      %v476 = vpop.permute.xlu0 %475
      %477 = vrot.lane.b32.xlu0 %v438, 67
      %v478 = vpop.permute.xlu0 %477
      %479 = vrot.lane.b32.xlu0 %v439, 67
      %v480 = vpop.permute.xlu0 %479
      %481 = vrot.lane.b32.xlu0 %v440, 67
      %v482 = vpop.permute.xlu0 %481
      %483 = vrot.lane.b32.xlu0 %v301, 67
      %v484 = vpop.permute.xlu0 %483
      %485 = vrot.lane.b32.xlu0 %v302, 67
      %v486 = vpop.permute.xlu0 %485
      %487 = vrot.lane.b32.xlu0 %v443, 67
      %v488 = vpop.permute.xlu0 %487
      %489 = vrot.lane.b32.xlu0 %v313, 67
      %v490 = vpop.permute.xlu0 %489
      %491 = vrot.lane.b32.xlu0 %v314, 67
      %v492 = vpop.permute.xlu0 %491
      %493 = vrot.lane.b32.xlu0 %v446, 67
      %v494 = vpop.permute.xlu0 %493
      %495 = vrot.lane.b32.xlu0 %v325, 67
      %v496 = vpop.permute.xlu0 %495
      %497 = vrot.lane.b32.xlu0 %v326, 67
      %v498 = vpop.permute.xlu0 %497
      %499 = vrot.lane.b32.xlu0 %v449, 67
      %v500 = vpop.permute.xlu0 %499
      %501 = vrot.lane.b32.xlu0 %v337, 67
      %v502 = vpop.permute.xlu0 %501
      %503 = vrot.lane.b32.xlu0 %v338, 67
      %v504 = vpop.permute.xlu0 %503
      %505 = vrot.lane.b32.xlu0 %v452, 67
      %v506 = vpop.permute.xlu0 %505
      %vm507 = vcmask 547840
      %v508 = vsel %vm507, %v454, %v456
      %v509 = vsel %vm507, %v456, %v458
      %v510 = vsel %vm507, %v460, %v462
      %v511 = vsel %vm507, %v462, %v464
      %v512 = vsel %vm507, %v466, %v468
      %v513 = vsel %vm507, %v468, %v470
      %v514 = vsel %vm507, %v472, %v474
      %v515 = vsel %vm507, %v474, %v476
      %v516 = vsel %vm507, %v478, %v480
      %v517 = vsel %vm507, %v480, %v482
      %v518 = vsel %vm507, %v484, %v486
      %v519 = vsel %vm507, %v486, %v488
      %v520 = vsel %vm507, %v490, %v492
      %v521 = vsel %vm507, %v492, %v494
      %v522 = vsel %vm507, %v496, %v498
      %v523 = vsel %vm507, %v498, %v500
      %v524 = vsel %vm507, %v502, %v504
      %v525 = vsel %vm507, %v504, %v506
      %v553 = vld [vmem:[%s1] sm:$0xff]
      %v555 = vcombine.high %v553, %v553
      %v557 = vunpack.c.l.s4 1983009808
      %v558 = vunpack.c.0.s8 %v557
      %v559 = vlaneseq
      %v560 = vshrl.u32 %v559, 7
      %v561 = vsub.s32 %v558, %v560
      %v562 = vrot.slane %v553, %v561
      %v564 = vunpack.c.l.s4 1983009808
      %v565 = vunpack.c.0.s8 %v564
      %v566 = vlaneseq
      %v567 = vshrl.u32 %v566, 7
      %v568 = vsub.s32 %v565, %v567
      %v569 = vrot.slane %v555, %v568
      %v570 = vcombine.high %v562, %v562
      %v571 = vcombine.high %v569, %v569
      %vm575 = vcmask 130048
      %v577 = vsel %vm575, %v571, 0
      %579 = vmatprep.subr.bf16.mxu0 %v326
      %580 = vmatpush1.bf16.msra.mxu0 %v325
      %581 = vmatprep.subr.bf16.mxu0 %v314
      %582 = vmatpush1.bf16.msra.mxu0 %v313
      %583 = vmatprep.subr.bf16.mxu0 %v302
      %584 = vmatpush1.bf16.msra.mxu0 %v301
      %585 = vmatprep.subr.bf16.mxu0 %v290
      %586 = vmatpush1.bf16.msra.mxu0 %v289
      %587 = vmatprep.subr.bf16.mxu0 %v278
      %588 = vmatpush1.bf16.msra.mxu0 %v277
      %589 = vmatprep.subr.bf16.mxu0 %v266
      %590 = vmatpush1.bf16.msra.mxu0 %v265
      %591 = vmatprep.subr.bf16.mxu0 %v254
      %592 = vmatpush1.bf16.msra.mxu0 %v253
      %593 = vmatprep.subr.bf16.mxu0 %v241
      %594 = vmatpush1.bf16.msra.mxu0 %v240
      %595 = vmatprep.subr.bf16.mxu0 %v422
      %596 = vmatpush2.bf16.msra.mxu0 %v421
      %597 = vmatprep.subr.bf16.mxu0 %v410
      %598 = vmatpush2.bf16.msra.mxu0 %v409
      %599 = vmatprep.subr.bf16.mxu0 %v398
      %600 = vmatpush2.bf16.msra.mxu0 %v397
      %601 = vmatprep.subr.bf16.mxu0 %v386
      %602 = vmatpush2.bf16.msra.mxu0 %v385
      %603 = vmatprep.subr.bf16.mxu0 %v374
      %604 = vmatpush2.bf16.msra.mxu0 %v373
      %605 = vmatprep.subr.bf16.mxu0 %v362
      %606 = vmatpush2.bf16.msra.mxu0 %v361
      %607 = vmatprep.subr.bf16.mxu0 %v350
      %608 = vmatpush2.bf16.msra.mxu0 %v349
      %609 = vmatprep.subr.bf16.mxu0 %v338
      %610 = vmatpush2.bf16.msra.mxu0 %v337
      %611 = vmatprep.mubr.bf16.mxu0 %v570
      %612 = vmatmul.mubr.bf16.gmra.mxu0 %v562
      %v613 = vpop.f32.mrf.mxu0
      %v614 = vadd.f32 0.0, %v613
      %v615 = vpop.f32.mrf.mxu0
      %v616 = vadd.f32 0.0, %v615
      %v617 = vpop.f32.mrf.mxu0
      %v618 = vpop.f32.mrf.mxu0
      %619 = vdwg.mxu0
      %620 = vmatprep.subr.bf16.mxu0 %v523
      %621 = vmatpush1.bf16.msra.mxu0 %v522
      %622 = vmatprep.subr.bf16.mxu0 %v521
      %623 = vmatpush1.bf16.msra.mxu0 %v520
      %624 = vmatprep.subr.bf16.mxu0 %v519
      %625 = vmatpush1.bf16.msra.mxu0 %v518
      %626 = vmatprep.subr.bf16.mxu0 %v517
      %627 = vmatpush1.bf16.msra.mxu0 %v516
      %628 = vmatprep.subr.bf16.mxu0 %v515
      %629 = vmatpush1.bf16.msra.mxu0 %v514
      %630 = vmatprep.subr.bf16.mxu0 %v513
      %631 = vmatpush1.bf16.msra.mxu0 %v512
      %632 = vmatprep.subr.bf16.mxu0 %v511
      %633 = vmatpush1.bf16.msra.mxu0 %v510
      %634 = vmatprep.subr.bf16.mxu0 %v509
      %635 = vmatpush1.bf16.msra.mxu0 %v508
      %636 = vmatprep.subr.bf16.mxu0 0
      %637 = vmatpush2.bf16.msra.mxu0 0
      %638 = vmatprep.subr.bf16.mxu0 0
      %639 = vmatpush2.bf16.msra.mxu0 0
      %640 = vmatprep.subr.bf16.mxu0 0
      %641 = vmatpush2.bf16.msra.mxu0 0
      %642 = vmatprep.subr.bf16.mxu0 0
      %643 = vmatpush2.bf16.msra.mxu0 0
      %644 = vmatprep.subr.bf16.mxu0 0
      %645 = vmatpush2.bf16.msra.mxu0 0
      %646 = vmatprep.subr.bf16.mxu0 0
      %647 = vmatpush2.bf16.msra.mxu0 0
      %648 = vmatprep.subr.bf16.mxu0 0
      %649 = vmatpush2.bf16.msra.mxu0 0
      %650 = vmatprep.subr.bf16.mxu0 %v525
      %651 = vmatpush2.bf16.msra.mxu0 %v524
      %652 = vmatprep.mubr.bf16.mxu0 %v577
      %653 = vmatmul.mubr.bf16.gmra.mxu0 %v569
      %v654 = vpop.f32.mrf.mxu0
      %v655 = vadd.f32 %v614, %v654
      %v656 = vpop.f32.mrf.mxu0
      %v657 = vadd.f32 %v616, %v656
      %v658 = vpop.f32.mrf.mxu0
      %v659 = vpop.f32.mrf.mxu0
      %660 = vdwg.mxu0
      %661 = vmatprep.subr.bf16.mxu0 0
      %662 = vmatpush1.bf16.msra.mxu0 %v323
      %663 = vmatprep.subr.bf16.mxu0 0
      %664 = vmatpush1.bf16.msra.mxu0 %v311
      %665 = vmatprep.subr.bf16.mxu0 0
      %666 = vmatpush1.bf16.msra.mxu0 %v299
      %667 = vmatprep.subr.bf16.mxu0 0
      %668 = vmatpush1.bf16.msra.mxu0 %v287
      %669 = vmatprep.subr.bf16.mxu0 0
      %670 = vmatpush1.bf16.msra.mxu0 %v275
      %671 = vmatprep.subr.bf16.mxu0 0
      %672 = vmatpush1.bf16.msra.mxu0 %v263
      %673 = vmatprep.subr.bf16.mxu0 0
      %674 = vmatpush1.bf16.msra.mxu0 %v251
      %675 = vmatprep.subr.bf16.mxu0 0
      %676 = vmatpush1.bf16.msra.mxu0 %v242
      %677 = vmatprep.subr.bf16.mxu0 0
      %678 = vmatpush2.bf16.msra.mxu0 %v419
      %679 = vmatprep.subr.bf16.mxu0 0
      %680 = vmatpush2.bf16.msra.mxu0 %v407
      %681 = vmatprep.subr.bf16.mxu0 0
      %682 = vmatpush2.bf16.msra.mxu0 %v395
      %683 = vmatprep.subr.bf16.mxu0 0
      %684 = vmatpush2.bf16.msra.mxu0 %v383
      %685 = vmatprep.subr.bf16.mxu0 0
      %686 = vmatpush2.bf16.msra.mxu0 %v371
      %687 = vmatprep.subr.bf16.mxu0 0
      %688 = vmatpush2.bf16.msra.mxu0 %v359
      %689 = vmatprep.subr.bf16.mxu0 0
      %690 = vmatpush2.bf16.msra.mxu0 %v347
      %691 = vmatprep.subr.bf16.mxu0 0
      %692 = vmatpush2.bf16.msra.mxu0 %v335
      %693 = vmatprep.mubr.bf16.mxu0 %v570
      %694 = vmatmul.mubr.bf16.gmra.mxu0 %v562
      %v695 = vpop.f32.mrf.mxu0
      %v696 = vadd.f32 0.0, %v695
      %v697 = vpop.f32.mrf.mxu0
      %v698 = vpop.f32.mrf.mxu0
      %v699 = vpop.f32.mrf.mxu0
      %700 = vdwg.mxu0
      %701 = vmatprep.subr.bf16.mxu0 0
      %702 = vmatpush1.bf16.msra.mxu0 %v500
      %703 = vmatprep.subr.bf16.mxu0 0
      %704 = vmatpush1.bf16.msra.mxu0 %v494
      %705 = vmatprep.subr.bf16.mxu0 0
      %706 = vmatpush1.bf16.msra.mxu0 %v488
      %707 = vmatprep.subr.bf16.mxu0 0
      %708 = vmatpush1.bf16.msra.mxu0 %v482
      %709 = vmatprep.subr.bf16.mxu0 0
      %710 = vmatpush1.bf16.msra.mxu0 %v476
      %711 = vmatprep.subr.bf16.mxu0 0
      %712 = vmatpush1.bf16.msra.mxu0 %v470
      %713 = vmatprep.subr.bf16.mxu0 0
      %714 = vmatpush1.bf16.msra.mxu0 %v464
      %715 = vmatprep.subr.bf16.mxu0 0
      %716 = vmatpush1.bf16.msra.mxu0 %v458
      %717 = vmatprep.subr.bf16.mxu0 0
      %718 = vmatpush2.bf16.msra.mxu0 0
      %719 = vmatprep.subr.bf16.mxu0 0
      %720 = vmatpush2.bf16.msra.mxu0 0
      %721 = vmatprep.subr.bf16.mxu0 0
      %722 = vmatpush2.bf16.msra.mxu0 0
      %723 = vmatprep.subr.bf16.mxu0 0
      %724 = vmatpush2.bf16.msra.mxu0 0
      %725 = vmatprep.subr.bf16.mxu0 0
      %726 = vmatpush2.bf16.msra.mxu0 0
      %727 = vmatprep.subr.bf16.mxu0 0
      %728 = vmatpush2.bf16.msra.mxu0 0
      %729 = vmatprep.subr.bf16.mxu0 0
      %730 = vmatpush2.bf16.msra.mxu0 0
      %731 = vmatprep.subr.bf16.mxu0 0
      %732 = vmatpush2.bf16.msra.mxu0 %v506
      %733 = vmatprep.mubr.bf16.mxu0 %v577
      %734 = vmatmul.mubr.bf16.gmra.mxu0 %v569
      %v735 = vpop.f32.mrf.mxu0
      %v736 = vadd.f32 %v696, %v735
      %v737 = vpop.f32.mrf.mxu0
      %v738 = vpop.f32.mrf.mxu0
      %v739 = vpop.f32.mrf.mxu0
      %740 = vdwg.mxu0
      %v741 = vld [vmem:[%s2] sm:$0x7]
      %743 = vset.pattern.permute.xlu0 0
      %744 = vperm.xlu0 %743, %v741
      %v745 = vpop.permute.xlu0 %744
      %v747 = vmul.f32 %v655, %v745
      %v748 = vmul.f32 %v657, %v745
      %v749 = vmul.f32 %v736, %v745
      %v750 = vld [vmem:[%s3] sm:$0x7]
      %752 = vset.pattern.permute.xlu0 0
      %753 = vperm.xlu0 %752, %v750
      %v754 = vpop.permute.xlu0 %753
      %v756 = vadd.f32 %v747, %v754
      %v757 = vadd.f32 %v748, %v754
      %v758 = vadd.f32 %v749, %v754
      %v759 = vld [vmem:[%s4] sm:$0xf]
      %v760 = vld [vmem:[%s4 + $0x4] sm:$0x3]
      %v761 = vpack.c.bf16 %v756, %v756
      %v762 = vpack.c.bf16 %v757, %v757
      %v763 = vpack.c.bf16 %v758, %v758
      %v766 = vunpack.c.l.b16 %v759
      %v767 = vunpack.c.l.b16 %v760
      %v768 = vpack.c.b16 %v767, %v766
      %vm769 = vcmask 23552
      %v771 = vsel %vm769, %v768, 0
      %vm773 = vcmask 1040384
      %vm774 = vcmask 1041408
      %v775 = vsel %vm773, 4294967295, 65535
      %v776 = vsel %vm774, %v775, 0
      %v778 = vand.u32 %v761, %v776
      %v781 = vand.u32 %v762, %v776
      %v784 = vand.u32 %v763, %v776
      %786 = vmatprep.subr.bf16.mxu0 0
      %787 = vmatpush1.bf16.msra.mxu0 0
      %788 = vmatprep.subr.bf16.mxu0 0
      %789 = vmatpush1.bf16.msra.mxu0 0
      %790 = vmatprep.subr.bf16.mxu0 0
      %791 = vmatpush1.bf16.msra.mxu0 0
      %792 = vmatprep.subr.bf16.mxu0 0
      %793 = vmatpush1.bf16.msra.mxu0 0
      %794 = vmatprep.subr.bf16.mxu0 0
      %795 = vmatpush1.bf16.msra.mxu0 0
      %796 = vmatprep.subr.bf16.mxu0 0
      %797 = vmatpush1.bf16.msra.mxu0 0
      %798 = vmatprep.subr.bf16.mxu0 0
      %799 = vmatpush1.bf16.msra.mxu0 0
      %800 = vmatprep.subr.bf16.mxu0 %v781
      %801 = vmatpush1.bf16.msra.mxu0 %v778
      %802 = vmatprep.subr.bf16.mxu0 0
      %803 = vmatpush2.bf16.msra.mxu0 0
      %804 = vmatprep.subr.bf16.mxu0 0
      %805 = vmatpush2.bf16.msra.mxu0 0
      %806 = vmatprep.subr.bf16.mxu0 0
      %807 = vmatpush2.bf16.msra.mxu0 0
      %808 = vmatprep.subr.bf16.mxu0 0
      %809 = vmatpush2.bf16.msra.mxu0 0
      %810 = vmatprep.subr.bf16.mxu0 0
      %811 = vmatpush2.bf16.msra.mxu0 0
      %812 = vmatprep.subr.bf16.mxu0 0
      %813 = vmatpush2.bf16.msra.mxu0 0
      %814 = vmatprep.subr.bf16.mxu0 0
      %815 = vmatpush2.bf16.msra.mxu0 0
      %816 = vmatprep.subr.bf16.mxu0 0
      %817 = vmatpush2.bf16.msra.mxu0 0
      %818 = vmatprep.mubr.bf16.mxu0 0
      %819 = vmatmul.mubr.bf16.gmra.mxu0 %v771
      %v820 = vpop.f32.mrf.mxu0
      %v821 = vadd.f32 0.0, %v820
      %v822 = vpop.f32.mrf.mxu0
      %v823 = vadd.f32 0.0, %v822
      %v824 = vpop.f32.mrf.mxu0
      %v825 = vadd.f32 0.0, %v824
      %v826 = vpop.f32.mrf.mxu0
      %v827 = vadd.f32 0.0, %v826
      %828 = vdwg.mxu0
      %829 = vmatprep.subr.bf16.mxu0 0
      %830 = vmatpush1.bf16.msra.mxu0 0
      %831 = vmatprep.subr.bf16.mxu0 0
      %832 = vmatpush1.bf16.msra.mxu0 0
      %833 = vmatprep.subr.bf16.mxu0 0
      %834 = vmatpush1.bf16.msra.mxu0 0
      %835 = vmatprep.subr.bf16.mxu0 0
      %836 = vmatpush1.bf16.msra.mxu0 0
      %837 = vmatprep.subr.bf16.mxu0 0
      %838 = vmatpush1.bf16.msra.mxu0 0
      %839 = vmatprep.subr.bf16.mxu0 0
      %840 = vmatpush1.bf16.msra.mxu0 0
      %841 = vmatprep.subr.bf16.mxu0 0
      %842 = vmatpush1.bf16.msra.mxu0 0
      %843 = vmatprep.subr.bf16.mxu0 0
      %844 = vmatpush1.bf16.msra.mxu0 %v784
      %845 = vmatprep.subr.bf16.mxu0 0
      %846 = vmatpush2.bf16.msra.mxu0 0
      %847 = vmatprep.subr.bf16.mxu0 0
      %848 = vmatpush2.bf16.msra.mxu0 0
      %849 = vmatprep.subr.bf16.mxu0 0
      %850 = vmatpush2.bf16.msra.mxu0 0
      %851 = vmatprep.subr.bf16.mxu0 0
      %852 = vmatpush2.bf16.msra.mxu0 0
      %853 = vmatprep.subr.bf16.mxu0 0
      %854 = vmatpush2.bf16.msra.mxu0 0
      %855 = vmatprep.subr.bf16.mxu0 0
      %856 = vmatpush2.bf16.msra.mxu0 0
      %857 = vmatprep.subr.bf16.mxu0 0
      %858 = vmatpush2.bf16.msra.mxu0 0
      %859 = vmatprep.subr.bf16.mxu0 0
      %860 = vmatpush2.bf16.msra.mxu0 0
      %861 = vmatprep.mubr.bf16.mxu0 0
      %862 = vmatmul.mubr.bf16.gmra.mxu0 %v771
      %v863 = vpop.f32.mrf.mxu0
      %v864 = vadd.f32 0.0, %v863
      %v865 = vpop.f32.mrf.mxu0
      %v866 = vpop.f32.mrf.mxu0
      %v867 = vadd.f32 0.0, %v866
      %v868 = vpop.f32.mrf.mxu0
      %869 = vdwg.mxu0
      %870 = vst [vmem:[%s224] sm:$0xff] %v821
      %871 = vst [vmem:[%s224 + $0x8] sm:$0xff] %v823
      %vm872 = vcmask 523264
      %873 = vst.msk [vmem:[%s224 + $0x10] sm:$0xff] %vm872, %v864
      %874 = vst [vmem:[%s224 + $0x18] sm:$0xf] %v825
      %875 = vst [vmem:[%s224 + $0x20] sm:$0xf] %v827
      %vm876 = vcmask 519168
      %877 = vst.msk [vmem:[%s224 + $0x28] sm:$0xf] %vm876, %v867
      %p878 = scmp.lt.s32.totalorder %s16, 1
      %s879 = scalar_select %p878, %s16, 1
      %s880 = smul.addr %s879, 6
      %s881 = smul.addr %s880, 8
      %s882 = scalar_lea.vmem %s5, %s881
      // Predicated region
      $region41: #{image_decoder_forward.5} parent=39 // pred_check
        %p883 = pneg %p144
      $region42: #{image_decoder_forward.5} parent=39 // pred_check_branch
        %885 = sbr.rel (%p883) target = $region44
      $region43: #{image_decoder_forward.5} parent=39 // pred_region
        _
      $region44: #{image_decoder_forward.5} parent=39 // pred_fallthru
        _
    $region40: #{image_decoder_forward.5} parent=5 // pred_fallthru
      _
    %p886 = scmp.le.s32.totalorder 2, %s11
    // Predicated region
    $region45: #{image_decoder_forward.5} parent=5 // pred_check
      %p887 = pneg %p886
    $region46: #{image_decoder_forward.5} parent=5 // pred_check_branch
      %889 = sbr.rel (%p887) target = $region48
    $region47: #{image_decoder_forward.5} parent=5 // pred_region
      %s890 = ssub.s32 %s11, 2
      // Predicated region
      $region49: #{image_decoder_forward.5} parent=47 // pred_check
        %p891 = pneg %p150
      $region50: #{image_decoder_forward.5} parent=47 // pred_check_branch
        %893 = sbr.rel (%p891) target = $region52
      $region51: #{image_decoder_forward.5} parent=47 // pred_region
        %p894 = scmp.lt.s32.totalorder %s17, 1
        %s895 = scalar_select %p894, %s17, 1
        %s896 = smul.addr %s895, 6
        %s897 = smul.addr %s896, 8
        %s898 = scalar_lea.vmem %s5, %s897
      $region52: #{image_decoder_forward.5} parent=47 // pred_fallthru
        _
    $region48: #{image_decoder_forward.5} parent=5 // pred_fallthru
      _
  $region6: #{image_decoder_forward.5} parent=0 // loop_footer
    %s15 = sadd.s32 1, %s11
  $region7: #{image_decoder_forward.5} parent=0 // loop_footer_branch
    %10 = sbr.rel target = $region3
  $region8: #{image_decoder_forward.5} parent=0 // loop_exit
    _

</llo_original>
